<compile_context>
chip_gen: v5e
topology: v5e:2x2
jax: 0.10.0
libtpu: 0.0.40
codegen_flags: <defaults>
</compile_context>

<pallas_src>
import functools

import jax
import jax.numpy as jnp
import numpy as np
from jax.experimental import pallas as pl
from jax.experimental.pallas import tpu as pltpu


# ----------------------------------------------------------------------------
# Kernel
# ----------------------------------------------------------------------------
def _primary_network_kernel(
    sp_ref,   # (BS, 4, N)  f32: rows 0..2 = biases of layers 1..3, row 3 = x
    w1_ref,   # (BS, n_in, N)    lane-dense [in, out] layout (wrapper transposed; tiny)
    w2_ref,   # (BS, N, N)       native [out, in] (or [in, out] if w23_in_out)
    w3_ref,   # (BS, N, N)
    w4_ref,   # (BS, 3G, N)      fused GMM head, native [out, in] layout
    out_ref,  # (BS, 3G)         interleaved [mean0, var0, pi0, mean1, ...]
    *,
    actuator_range: float,
    n_inputs: int,
    w23_in_out: bool,
):
    f32 = jnp.float32
    sp = sp_ref[...]                                  # (BS, 4, N) f32
    wdt = w2_ref.dtype                                # weight streaming dtype (bf16 default)

    # ---- layer 1: relu(x @ w1 + b1) -------------------------------------
    x = sp[:, 3:4, :n_inputs].astype(w1_ref.dtype)    # (BS, 1, n_in)
    h = jnp.einsum('bxi,bin->bxn', x, w1_ref[...], preferred_element_type=f32)
    h = jnp.maximum(h + sp[:, 0:1, :], 0.0)

    # ---- layers 2..3 ------------------------------------------------------
    # Native [out, in] layout -> contract the weight's LAST axis (transposed
    # RHS, handled by the MXU like flash-attention's 'bqd,bkd->bqk').
    # TODO(synk): if pl.lower_as_mlir ever shows per-tile XLU relayouts on this
    # path, have the hypernetwork emit [in, out] and use w23_layout="in_out".
    eq = 'bxm,bmn->bxn' if w23_in_out else 'bxm,bnm->bxn'
    h = jnp.einsum(eq, h.astype(wdt), w2_ref[...], preferred_element_type=f32)
    h = jnp.maximum(h + sp[:, 1:2, :], 0.0)
    h = jnp.einsum(eq, h.astype(wdt), w3_ref[...], preferred_element_type=f32)
    h = jnp.maximum(h + sp[:, 2:3, :], 0.0)

    # ---- fused GMM head ---------------------------------------------------
    z = jnp.einsum('bxm,bom->bxo', h.astype(w4_ref.dtype), w4_ref[...],
                   preferred_element_type=f32)[:, 0, :]      # (BS, 3G)

    BS, L = z.shape                                   # L = 3 * n_GMM
    mod3 = jax.lax.broadcasted_iota(jnp.int32, (BS, L), 1) % 3
    pi_maskf = (mod3 == 2).astype(f32)

    # sparsemax over the pi lanes only (sort-free O(G^2) formulation):
    #   k_i = #{j in pi : z_j >= z_i},  S_i = sum_{j in pi : z_j >= z_i} z_j
    #   i in support  <=>  1 + k_i * z_i > S_i  (and i is a pi lane)
    #   tau = (sum_{support} z - 1) / |support|,  pi_out = max(z - tau, 0)
    ge = (z[:, None, :] >= z[:, :, None]).astype(f32) * pi_maskf[:, None, :]
    k = jnp.sum(ge, axis=-1)                                  # (BS, L)
    s = jnp.sum(ge * z[:, None, :], axis=-1)                  # (BS, L)
    supp = jnp.where((1.0 + k * z) > s, pi_maskf, 0.0)        # (BS, L)
    k_z = jnp.sum(supp, axis=-1, keepdims=True)               # (BS, 1), >= 1
    s_z = jnp.sum(supp * z, axis=-1, keepdims=True)           # (BS, 1)
    tau = (s_z - 1.0) / k_z
    pi_out = jnp.maximum(z - tau, 0.0)

    mean_out = (jnp.tanh(z) + 1.0) * (0.5 * actuator_range)
    var_out = jnp.abs(z)

    out_ref[...] = jnp.where(mod3 == 0, mean_out,
                             jnp.where(mod3 == 1, var_out, pi_out))


# ----------------------------------------------------------------------------
# Wrapper helpers
# ----------------------------------------------------------------------------
def _cdiv(a, b):
    return -(-a // b)


def _padded_tile_bytes(block_shape, dtype):
    """VMEM bytes of one pipelined block after (sublane, lane) padding."""
    itemsize = jnp.dtype(dtype).itemsize
    sublane = {4: 8, 2: 16, 1: 32}.get(itemsize, 8)
    dims = tuple(int(d) for d in block_shape)
    if len(dims) == 1:
        dims = (1,) + dims
    *lead, r, c = dims
    r_pad = _cdiv(r, sublane) * sublane
    c_pad = _cdiv(c, 128) * 128
    lead_n = 1
    for d in lead:
        lead_n *= d
    return lead_n * r_pad * c_pad * itemsize


def _default_block_batch():
    """Per-generation batch tile: bounded by scoped VMEM on v5e, by per-step
    overhead vs. 3.2 TB/s HBM on v7x."""
    try:
        kind = jax.devices()[0].device_kind.lower()
    except Exception:
        return 32
    if "v5" in kind:
        return 32
    if "v6" in kind:
        return 64
    if "7" in kind:
        return 128
    return 32


# ----------------------------------------------------------------------------
# Wrapper
# ----------------------------------------------------------------------------
def primary_network_forward(x, params, actuator_range, *, block_batch=None,
                            weight_dtype=jnp.bfloat16, w23_layout="out_in"):
    """x: [B, n_inputs] f32.  params = (w1, b1, w2, b2, w3, b3, w4) in the
    module's layouts: w1 [B, N, n_in], b1/b2/b3 [B, N, 1], w2/w3 [B, N, N],
    w4 [B, 3*G, N].  With w23_layout="in_out", w2/w3 are expected pre-transposed
    ([in, out], e.g. emitted that way by the hypernetwork at zero cost).
    Returns [B, 3*G] f32 (mean/var/pi interleaved exactly like the module)."""
    w1, b1, w2, b2, w3, b3, w4 = params
    B, n_in = x.shape
    N = w2.shape[-1]
    G3 = w4.shape[1]          # 3 * n_GMM
    assert n_in <= N, "n_inputs must fit in one lane row to pack with the biases"

    # --- batch tile -------------------------------------------------------
    if block_batch is None:
        block_batch = _default_block_batch()
    bs = max(8, (min(int(block_batch), B) // 8) * 8)
    # Prefer >= 2 grid steps when the batch allows it, so the "parallel" batch
    # axis can actually be sharded across both v7x TensorCores.
    if _cdiv(B, bs) < 2 and B > 8:
        bs = max(8, _cdiv(_cdiv(B, 2), 8) * 8)
    B_pad = _cdiv(B, bs) * bs

    def pad_b(a):
        if B_pad == B:
            return a
        return jnp.pad(a, [(0, B_pad - B)] + [(0, 0)] * (a.ndim - 1))

    wdt = jnp.dtype(weight_dtype)

    # Small tensor: rows 0..2 = biases of layers 1..3, row 3 = x (zeros beyond
    # n_in).  Kept f32 (tiny); removes the separate lane-sparse x stream.
    b_rows = jnp.stack([b1[:, :, 0], b2[:, :, 0], b3[:, :, 0]], axis=1)      # (B, 3, N)
    xrow = jnp.zeros((B, 1, N), jnp.float32).at[:, 0, :n_in].set(
        x.astype(jnp.float32))
    sp_all = pad_b(jnp.concatenate([b_rows.astype(jnp.float32), xrow], axis=1))

    # w1 is tiny: transposing it here (to the lane-dense [in, out] layout) is
    # cheap and removes a 16x VMEM-inflated, 16-byte-row DMA block.  The big
    # weights get only a dtype cast (bf16 streaming), no transposes.
    w1p = pad_b(jnp.swapaxes(w1, 1, 2).astype(wdt))      # (B_pad, n_in, N)
    w2p = pad_b(w2.astype(wdt))
    w3p = pad_b(w3.astype(wdt))
    w4p = pad_b(w4.astype(wdt))

    in_specs = [
        pl.BlockSpec((bs, 4, N),    lambda g: (g, 0, 0)),   # biases + x
        pl.BlockSpec((bs, n_in, N), lambda g: (g, 0, 0)),   # w1 [in, out]
        pl.BlockSpec((bs, N, N),    lambda g: (g, 0, 0)),   # w2
        pl.BlockSpec((bs, N, N),    lambda g: (g, 0, 0)),   # w3
        pl.BlockSpec((bs, G3, N),   lambda g: (g, 0, 0)),   # w4 (fused heads)
    ]
    out_spec = pl.BlockSpec((bs, G3), lambda g: (g, 0))

    # Explicit VMEM budget: double-buffered tiles + slack for in-kernel temps.
    tile_bytes = (_padded_tile_bytes((bs, 4, N), jnp.float32)
                  + _padded_tile_bytes((bs, n_in, N), wdt)
                  + 2 * _padded_tile_bytes((bs, N, N), wdt)
                  + _padded_tile_bytes((bs, G3, N), wdt)
                  + _padded_tile_bytes((bs, G3), jnp.float32))
    vmem_limit = int(2 * tile_bytes + 8 * 2**20)

    # Advisory cost: this call is bandwidth-heavy (~0.5 FLOP/byte).
    flops = 2 * B_pad * (n_in * N + 2 * N * N + G3 * N)
    bytes_accessed = int(sp_all.nbytes + w1p.nbytes + w2p.nbytes
                         + w3p.nbytes + w4p.nbytes + B_pad * G3 * 4)
    cost = pl.CostEstimate(flops=int(flops), transcendentals=int(B_pad * G3),
                           bytes_accessed=bytes_accessed)

    kernel = functools.partial(_primary_network_kernel,
                               actuator_range=float(actuator_range),
                               n_inputs=int(n_in),
                               w23_in_out=(w23_layout == "in_out"))

    out = pl.pallas_call(
        kernel,
        out_shape=jax.ShapeDtypeStruct((B_pad, G3), jnp.float32),
        grid_spec=pltpu.PrefetchScalarGridSpec(
            num_scalar_prefetch=0,
            grid=(B_pad // bs,),
            in_specs=in_specs,
            out_specs=out_spec,
        ),
        compiler_params=pltpu.CompilerParams(
            dimension_semantics=("parallel",),
            vmem_limit_bytes=vmem_limit),
        cost_estimate=cost,
    )(sp_all, w1p, w2p, w3p, w4p)

    return out[:B]


# ----------------------------------------------------------------------------
# Pure-JAX reference (module semantics, f32)
# ----------------------------------------------------------------------------
def _sparsemax_ref(z):
    K = z.shape[-1]
    z_sorted = jnp.sort(z, axis=-1)[:, ::-1]
    cs = jnp.cumsum(z_sorted, axis=-1)
    ks = jnp.arange(1, K + 1, dtype=z.dtype)
    supp = (1.0 + ks * z_sorted) > cs
    k_z = jnp.sum(supp, axis=-1, keepdims=True)
    s_z = jnp.take_along_axis(cs, k_z.astype(jnp.int32) - 1, axis=-1)
    tau = (s_z - 1.0) / k_z
    return jnp.maximum(z - tau, 0.0)


def _forward_ref(x, params, actuator_range):
    w1, b1, w2, b2, w3, b3, w4 = params
    h = jnp.maximum(jnp.einsum('bni,bi->bn', w1, x) + b1[:, :, 0], 0.0)
    h = jnp.maximum(jnp.einsum('bnm,bm->bn', w2, h) + b2[:, :, 0], 0.0)
    h = jnp.maximum(jnp.einsum('bnm,bm->bn', w3, h) + b3[:, :, 0], 0.0)
    o = jnp.einsum('bon,bn->bo', w4, h)
    means = (jnp.tanh(o[:, 0::3]) + 1.0) / 2.0 * actuator_range
    vars_ = jnp.abs(o[:, 1::3])
    pis = _sparsemax_ref(o[:, 2::3])
    return o.at[:, 0::3].set(means).at[:, 1::3].set(vars_).at[:, 2::3].set(pis)


# ----------------------------------------------------------------------------
# Main
# ----------------------------------------------------------------------------
if __name__ == "__main__":
    # Small, forward-consistent shapes.
    B = 16               # batch (each sample has its own hypernetwork weights)
    n_inputs = 4         # previous-arm angle inputs
    N = 128              # nodes_per_layer
    n_GMM = 8            # number of Gaussians -> output dim = 3 * n_GMM = 24
    actuator_range = 2.0

    key = jax.random.PRNGKey(0)
    ks = jax.random.split(key, 8)

    # Deterministic synthetic "hypernetwork" weights (scaled for stability).
    w1 = jax.random.normal(ks[0], (B, N, n_inputs), jnp.float32) / np.sqrt(n_inputs)
    b1 = jax.random.normal(ks[1], (B, N, 1), jnp.float32) * 0.1
    w2 = jax.random.normal(ks[2], (B, N, N), jnp.float32) / np.sqrt(N)
    b2 = jax.random.normal(ks[3], (B, N, 1), jnp.float32) * 0.1
    w3 = jax.random.normal(ks[4], (B, N, N), jnp.float32) / np.sqrt(N)
    b3 = jax.random.normal(ks[5], (B, N, 1), jnp.float32) * 0.1
    w4 = jax.random.normal(ks[6], (B, 3 * n_GMM, N), jnp.float32) / np.sqrt(N)
    params = (w1, b1, w2, b2, w3, b3, w4)

    x = jax.random.normal(ks[7], (B, n_inputs), jnp.float32)

    ref = jax.block_until_ready(_forward_ref(x, params, actuator_range))

    # 1) Exact-f32 weight path: tight check against the module reference.
    out_f32 = jax.block_until_ready(
        primary_network_forward(x, params, actuator_range,
                                block_batch=8, weight_dtype=jnp.float32))
    np.testing.assert_allclose(np.asarray(out_f32), np.asarray(ref),
                               rtol=2e-3, atol=2e-3)

    # 2) Default bf16 weight-streaming path (the performance configuration):
    #    within bf16 rounding of the f32 module reference.
    out_bf16 = jax.block_until_ready(
        primary_network_forward(x, params, actuator_range))
    np.testing.assert_allclose(np.asarray(out_bf16), np.asarray(ref),
                               rtol=1e-1, atol=1e-1)

    # 3) Hypernetwork-pre-transposed w2/w3 ([in, out]) path: same math via the
    #    canonical (non-transposed-RHS) MXU contraction.
    params_t = (w1, b1, jnp.swapaxes(w2, 1, 2), b2,
                jnp.swapaxes(w3, 1, 2), b3, w4)
    out_t = jax.block_until_ready(
        primary_network_forward(x, params_t, actuator_range,
                                block_batch=8, w23_layout="in_out"))
    np.testing.assert_allclose(np.asarray(out_t), np.asarray(out_bf16),
                               rtol=2e-3, atol=2e-3)

    print("KERNEL_OK")
</pallas_src>

<mosaic_0001>
module attributes {stable_mosaic.version = 11 : i64} {
  func.func @_primary_network_kernel(%arg0: i32, %arg1: memref<8x4x128xf32, #tpu.memory_space<vmem>>, %arg2: memref<8x4x128xf32, #tpu.memory_space<vmem>>, %arg3: memref<8x128x128xf32, #tpu.memory_space<vmem>>, %arg4: memref<8x128x128xf32, #tpu.memory_space<vmem>>, %arg5: memref<8x24x128xf32, #tpu.memory_space<vmem>>, %arg6: memref<8x24xf32, #tpu.memory_space<vmem>>) attributes {dimension_semantics = [#tpu.dimension_semantics<parallel>], iteration_bounds = array<i64: 2>, scalar_prefetch = 0 : i64, scratch_operands = 0 : i64, tpu.core_type = #tpu.core_type<tc>, window_params = [{transform_indices = @transform_0, window_bounds = array<i64: 8, 4, 128>}, {transform_indices = @transform_1, window_bounds = array<i64: 8, 4, 128>}, {transform_indices = @transform_2, window_bounds = array<i64: 8, 128, 128>}, {transform_indices = @transform_3, window_bounds = array<i64: 8, 128, 128>}, {transform_indices = @transform_4, window_bounds = array<i64: 8, 24, 128>}, {transform_indices = @transform_5, window_bounds = array<i64: 8, 24>}]} {
    %c0 = arith.constant 0 : index
    %c0_0 = arith.constant 0 : index
    %c0_1 = arith.constant 0 : index
    %0 = vector.load %arg1[%c0, %c0_0, %c0_1] : memref<8x4x128xf32, #tpu.memory_space<vmem>>, vector<8x4x128xf32>
    %1 = vector.extract_strided_slice %0 {offsets = [0, 3, 0], sizes = [8, 1, 4], strides = [1, 1, 1]} : vector<8x4x128xf32> to vector<8x1x4xf32>
    %c0_2 = arith.constant 0 : index
    %c0_3 = arith.constant 0 : index
    %c0_4 = arith.constant 0 : index
    %2 = vector.load %arg2[%c0_2, %c0_3, %c0_4] : memref<8x4x128xf32, #tpu.memory_space<vmem>>, vector<8x4x128xf32>
    "tpu.trace_start"() <{level = 10 : i32, message = "bxi,bin->bxn"}> : () -> ()
    %cst = arith.constant dense<0.000000e+00> : vector<8x1x128xf32>
    %3 = tpu.matmul %1, %2, %cst {dimension_numbers = #tpu.dot_dimension_numbers<[2], [1], [1], [2], [0, 0, 0, 1, 1, 2], [0], [0]>} : vector<8x1x4xf32>, vector<8x4x128xf32>, vector<8x1x128xf32> -> vector<8x1x128xf32>
    "tpu.trace_stop"() : () -> ()
    %4 = vector.extract_strided_slice %0 {offsets = [0, 0, 0], sizes = [8, 1, 128], strides = [1, 1, 1]} : vector<8x4x128xf32> to vector<8x1x128xf32>
    %5 = arith.addf %3, %4 : vector<8x1x128xf32>
    %cst_5 = arith.constant 0.000000e+00 : f32
    %6 = vector.broadcast %cst_5 : f32 to vector<8x1x128xf32>
    %7 = arith.maximumf %5, %6 : vector<8x1x128xf32>
    %c0_6 = arith.constant 0 : index
    %c0_7 = arith.constant 0 : index
    %c0_8 = arith.constant 0 : index
    %8 = vector.load %arg3[%c0_6, %c0_7, %c0_8] : memref<8x128x128xf32, #tpu.memory_space<vmem>>, vector<8x128x128xf32>
    "tpu.trace_start"() <{level = 10 : i32, message = "bxm,bnm->bxn"}> : () -> ()
    %cst_9 = arith.constant dense<0.000000e+00> : vector<8x1x128xf32>
    %9 = tpu.matmul %7, %8, %cst_9 {dimension_numbers = #tpu.dot_dimension_numbers<[2], [2], [1], [1], [0, 0, 0, 1, 1, 1], [0], [0]>} : vector<8x1x128xf32>, vector<8x128x128xf32>, vector<8x1x128xf32> -> vector<8x1x128xf32>
    "tpu.trace_stop"() : () -> ()
    %10 = vector.extract_strided_slice %0 {offsets = [0, 1, 0], sizes = [8, 1, 128], strides = [1, 1, 1]} : vector<8x4x128xf32> to vector<8x1x128xf32>
    %11 = arith.addf %9, %10 : vector<8x1x128xf32>
    %cst_10 = arith.constant 0.000000e+00 : f32
    %12 = vector.broadcast %cst_10 : f32 to vector<8x1x128xf32>
    %13 = arith.maximumf %11, %12 : vector<8x1x128xf32>
    %c0_11 = arith.constant 0 : index
    %c0_12 = arith.constant 0 : index
    %c0_13 = arith.constant 0 : index
    %14 = vector.load %arg4[%c0_11, %c0_12, %c0_13] : memref<8x128x128xf32, #tpu.memory_space<vmem>>, vector<8x128x128xf32>
    "tpu.trace_start"() <{level = 10 : i32, message = "bxm,bnm->bxn"}> : () -> ()
    %cst_14 = arith.constant dense<0.000000e+00> : vector<8x1x128xf32>
    %15 = tpu.matmul %13, %14, %cst_14 {dimension_numbers = #tpu.dot_dimension_numbers<[2], [2], [1], [1], [0, 0, 0, 1, 1, 1], [0], [0]>} : vector<8x1x128xf32>, vector<8x128x128xf32>, vector<8x1x128xf32> -> vector<8x1x128xf32>
    "tpu.trace_stop"() : () -> ()
    %16 = vector.extract_strided_slice %0 {offsets = [0, 2, 0], sizes = [8, 1, 128], strides = [1, 1, 1]} : vector<8x4x128xf32> to vector<8x1x128xf32>
    %17 = arith.addf %15, %16 : vector<8x1x128xf32>
    %cst_15 = arith.constant 0.000000e+00 : f32
    %18 = vector.broadcast %cst_15 : f32 to vector<8x1x128xf32>
    %19 = arith.maximumf %17, %18 : vector<8x1x128xf32>
    %c0_16 = arith.constant 0 : index
    %c0_17 = arith.constant 0 : index
    %c0_18 = arith.constant 0 : index
    %20 = vector.load %arg5[%c0_16, %c0_17, %c0_18] : memref<8x24x128xf32, #tpu.memory_space<vmem>>, vector<8x24x128xf32>
    "tpu.trace_start"() <{level = 10 : i32, message = "bxm,bom->bxo"}> : () -> ()
    %cst_19 = arith.constant dense<0.000000e+00> : vector<8x1x24xf32>
    %21 = tpu.matmul %19, %20, %cst_19 {dimension_numbers = #tpu.dot_dimension_numbers<[2], [2], [1], [1], [0, 0, 0, 1, 1, 1], [0], [0]>} : vector<8x1x128xf32>, vector<8x24x128xf32>, vector<8x1x24xf32> -> vector<8x1x24xf32>
    "tpu.trace_stop"() : () -> ()
    %22 = vector.shape_cast %21 : vector<8x1x24xf32> to vector<8x24xf32>
    %23 = tpu.iota {dimensions = array<i32: 1>} : vector<8x24xi32>
    %c3_i32 = arith.constant 3 : i32
    %c0_i32 = arith.constant 0 : i32
    %24 = arith.cmpi eq, %c3_i32, %c0_i32 : i32
    %c1_i32 = arith.constant 1 : i32
    %25 = arith.select %24, %c1_i32, %c3_i32 : i32
    %26 = vector.broadcast %25 : i32 to vector<8x24xi32>
    %27 = arith.remsi %23, %26 : vector<8x24xi32>
    %c0_i32_20 = arith.constant 0 : i32
    %28 = vector.broadcast %c0_i32_20 : i32 to vector<8x24xi32>
    %29 = arith.cmpi ne, %27, %28 : vector<8x24xi32>
    %c0_i32_21 = arith.constant 0 : i32
    %30 = vector.broadcast %c0_i32_21 : i32 to vector<8x24xi32>
    %31 = arith.cmpi slt, %27, %30 : vector<8x24xi32>
    %c0_i32_22 = arith.constant 0 : i32
    %32 = arith.cmpi slt, %25, %c0_i32_22 : i32
    %33 = vector.broadcast %32 : i1 to vector<8x24xi1>
    %34 = vector.broadcast %33 : vector<8x24xi1> to vector<8x24xi1>
    %35 = arith.xori %31, %34 : vector<8x24xi1>
    %36 = arith.andi %35, %29 : vector<8x24xi1>
    %37 = vector.broadcast %25 : i32 to vector<8x24xi32>
    %38 = arith.addi %27, %37 : vector<8x24xi32>
    %39 = arith.select %36, %38, %27 : vector<8x24xi1>, vector<8x24xi32>
    %c2_i32 = arith.constant 2 : i32
    %40 = vector.broadcast %c2_i32 : i32 to vector<8x24xi32>
    %41 = arith.cmpi eq, %39, %40 : vector<8x24xi32>
    %42 = arith.extui %41 : vector<8x24xi1> to vector<8x24xi32>
    %43 = arith.sitofp %42 : vector<8x24xi32> to vector<8x24xf32>
    %44 = vector.shape_cast %22 : vector<8x24xf32> to vector<8x1x24xf32>
    %45 = vector.shape_cast %22 : vector<8x24xf32> to vector<8x24x1xf32>
    %46 = vector.broadcast %44 : vector<8x1x24xf32> to vector<8x24x24xf32>
    %47 = vector.broadcast %45 : vector<8x24x1xf32> to vector<8x24x24xf32>
    %48 = arith.cmpf oge, %46, %47 : vector<8x24x24xf32>
    %49 = arith.extui %48 : vector<8x24x24xi1> to vector<8x24x24xi32>
    %50 = arith.sitofp %49 : vector<8x24x24xi32> to vector<8x24x24xf32>
    %51 = vector.shape_cast %43 : vector<8x24xf32> to vector<8x1x24xf32>
    %52 = vector.broadcast %51 : vector<8x1x24xf32> to vector<8x24x24xf32>
    %53 = arith.mulf %50, %52 : vector<8x24x24xf32>
    %cst_23 = arith.constant dense<0.000000e+00> : vector<8x24xf32>
    %54 = vector.multi_reduction <add>, %53, %cst_23 [2] : vector<8x24x24xf32> to vector<8x24xf32>
    %55 = vector.shape_cast %22 : vector<8x24xf32> to vector<8x1x24xf32>
    %56 = vector.broadcast %55 : vector<8x1x24xf32> to vector<8x24x24xf32>
    %57 = arith.mulf %53, %56 : vector<8x24x24xf32>
    %cst_24 = arith.constant dense<0.000000e+00> : vector<8x24xf32>
    %58 = vector.multi_reduction <add>, %57, %cst_24 [2] : vector<8x24x24xf32> to vector<8x24xf32>
    %59 = arith.mulf %54, %22 : vector<8x24xf32>
    %cst_25 = arith.constant 1.000000e+00 : f32
    %60 = vector.broadcast %cst_25 : f32 to vector<8x24xf32>
    %61 = arith.addf %60, %59 : vector<8x24xf32>
    %62 = arith.cmpf ogt, %61, %58 : vector<8x24xf32>
    %cst_26 = arith.constant 0.000000e+00 : f32
    %63 = vector.broadcast %cst_26 : f32 to vector<8x24xf32>
    %64 = arith.select %62, %43, %63 : vector<8x24xi1>, vector<8x24xf32>
    %cst_27 = arith.constant dense<0.000000e+00> : vector<8xf32>
    %65 = vector.multi_reduction <add>, %64, %cst_27 [1] : vector<8x24xf32> to vector<8xf32>
    %66 = vector.shape_cast %65 : vector<8xf32> to vector<8x1xf32>
    %67 = arith.mulf %64, %22 : vector<8x24xf32>
    %cst_28 = arith.constant dense<0.000000e+00> : vector<8xf32>
    %68 = vector.multi_reduction <add>, %67, %cst_28 [1] : vector<8x24xf32> to vector<8xf32>
    %69 = vector.shape_cast %68 : vector<8xf32> to vector<8x1xf32>
    %cst_29 = arith.constant 1.000000e+00 : f32
    %70 = vector.broadcast %cst_29 : f32 to vector<8x1xf32>
    %71 = arith.subf %69, %70 : vector<8x1xf32>
    %72 = arith.divf %71, %66 : vector<8x1xf32>
    %73 = vector.broadcast %72 : vector<8x1xf32> to vector<8x24xf32>
    %74 = arith.subf %22, %73 : vector<8x24xf32>
    %cst_30 = arith.constant 0.000000e+00 : f32
    %75 = vector.broadcast %cst_30 : f32 to vector<8x24xf32>
    %76 = arith.maximumf %74, %75 : vector<8x24xf32>
    %77 = math.tanh %22 : vector<8x24xf32>
    %cst_31 = arith.constant 1.000000e+00 : f32
    %78 = vector.broadcast %cst_31 : f32 to vector<8x24xf32>
    %79 = arith.addf %77, %78 : vector<8x24xf32>
    %cst_32 = arith.constant 1.000000e+00 : f32
    %80 = vector.broadcast %cst_32 : f32 to vector<8x24xf32>
    %81 = arith.mulf %79, %80 : vector<8x24xf32>
    %82 = math.absf %22 : vector<8x24xf32>
    %c0_i32_33 = arith.constant 0 : i32
    %83 = vector.broadcast %c0_i32_33 : i32 to vector<8x24xi32>
    %84 = arith.cmpi eq, %39, %83 : vector<8x24xi32>
    %c1_i32_34 = arith.constant 1 : i32
    %85 = vector.broadcast %c1_i32_34 : i32 to vector<8x24xi32>
    %86 = arith.cmpi eq, %39, %85 : vector<8x24xi32>
    %87 = arith.select %86, %82, %76 : vector<8x24xi1>, vector<8x24xf32>
    %88 = arith.select %84, %81, %87 : vector<8x24xi1>, vector<8x24xf32>
    %c0_35 = arith.constant 0 : index
    %c0_36 = arith.constant 0 : index
    %89 = vector.load %arg6[%c0_35, %c0_36] : memref<8x24xf32, #tpu.memory_space<vmem>>, vector<8x24xf32>
    tpu.vector_store %arg6[%c0_35, %c0_36], %88 {strides = array<i32>} : memref<8x24xf32, #tpu.memory_space<vmem>>, vector<8x24xf32>,
    return
  }
  func.func @transform_0(%arg0: i32) -> (i32, i32, i32) {
    %c0_i32 = arith.constant 0 : i32
    %c0_i32_0 = arith.constant 0 : i32
    %c0_i32_1 = arith.constant 0 : i32
    return %arg0, %c0_i32, %c0_i32_0 : i32, i32, i32
  }
  func.func @transform_1(%arg0: i32) -> (i32, i32, i32) {
    %c0_i32 = arith.constant 0 : i32
    %c0_i32_0 = arith.constant 0 : i32
    %c0_i32_1 = arith.constant 0 : i32
    return %arg0, %c0_i32, %c0_i32_0 : i32, i32, i32
  }
  func.func @transform_2(%arg0: i32) -> (i32, i32, i32) {
    %c0_i32 = arith.constant 0 : i32
    %c0_i32_0 = arith.constant 0 : i32
    %c0_i32_1 = arith.constant 0 : i32
    return %arg0, %c0_i32, %c0_i32_0 : i32, i32, i32
  }
  func.func @transform_3(%arg0: i32) -> (i32, i32, i32) {
    %c0_i32 = arith.constant 0 : i32
    %c0_i32_0 = arith.constant 0 : i32
    %c0_i32_1 = arith.constant 0 : i32
    return %arg0, %c0_i32, %c0_i32_0 : i32, i32, i32
  }
  func.func @transform_4(%arg0: i32) -> (i32, i32, i32) {
    %c0_i32 = arith.constant 0 : i32
    %c0_i32_0 = arith.constant 0 : i32
    %c0_i32_1 = arith.constant 0 : i32
    return %arg0, %c0_i32, %c0_i32_0 : i32, i32, i32
  }
  func.func @transform_5(%arg0: i32) -> (i32, i32) {
    %c0_i32 = arith.constant 0 : i32
    %c0_i32_0 = arith.constant 0 : i32
    return %arg0, %c0_i32 : i32, i32
  }
}

</mosaic_0001>

<llo_original>
// kernel: tpu_custom_call.1
$region0: #{tpu_custom_call.1}
  #allocation0 [shape = 'u32[]', space=smem, size = 0x4, offset = 0x4, fixed_abs, tag = 'smem constant byte address 0x4 - core index']
  #allocation1 [shape = 'u32[72,128]{1,0:T(1,128)}', space=vmem, size = 0x9000, scoped, tag = 'internal scratch']
  %s0 = inlined_call_operand.hbm [shape: f32[16,4,128], index: 0, kind: input, shape index: {}]
  %s1 = inlined_call_operand.hbm [shape: f32[16,4,128], index: 1, kind: input, shape index: {}]
  %s2 = inlined_call_operand.hbm [shape: f32[16,128,128], index: 2, kind: input, shape index: {}]
  %s3 = inlined_call_operand.hbm [shape: f32[16,128,128], index: 3, kind: input, shape index: {}]
  %s4 = inlined_call_operand.hbm [shape: f32[16,24,128], index: 4, kind: input, shape index: {}]
  %s5 = inlined_call_operand.hbm [shape: f32[16,24], index: 5, kind: output, shape index: {}]
  %s6 = sld [smem:[#allocation0]]
  $region73: #{tpu_custom_call.1} parent=0
    _
  %s8 = ssub.s32 1, %s6
  %s9 = scalar_select 0, %s8, %s6
  $region1: #{tpu_custom_call.1} parent=0
    #allocation2 [shape = 'u8[32768]{0}', space=vmem, size = 0x8000, scoped, tag = 'input window, operand 0']
    #allocation3 [shape = 's32[2]{0}', space=sflag, size = 0x8, scoped, tag = 'scoped memory for tpu_custom_call.1']
    #allocation4 [shape = 's32[2]{0}', space=sflag, size = 0x8, scoped, tag = 'scoped memory for tpu_custom_call.1']
    #allocation5 [shape = 'u8[32768]{0}', space=vmem, size = 0x8000, scoped, tag = 'input window, operand 1']
    #allocation6 [shape = 's32[2]{0}', space=sflag, size = 0x8, scoped, tag = 'scoped memory for tpu_custom_call.1']
    #allocation7 [shape = 'u8[1048576]{0}', space=vmem, size = 0x100000, scoped, tag = 'input window, operand 2']
    #allocation8 [shape = 'u8[1048576]{0}', space=vmem, size = 0x100000, scoped, tag = 'input window, operand 3']
    #allocation9 [shape = 's32[2]{0}', space=sflag, size = 0x8, scoped, tag = 'scoped memory for tpu_custom_call.1']
    #allocation10 [shape = 'u8[196608]{0}', space=vmem, size = 0x30000, scoped, tag = 'input window, operand 4']
    #allocation11 [shape = 'u8[8192]{0}', space=vmem, size = 0x2000, scoped, tag = 'output window, operand 0']
    %10 = vsyncpa [#allocation3], 0
    %s11 = scalar_lea.sflag [#allocation3], 1
    %12 = vsyncpa %s11, 0
    %13 = vsyncpa [#allocation6], 0
    %s14 = scalar_lea.sflag [#allocation6], 1
    %15 = vsyncpa %s14, 0
    %16 = vsyncpa [#allocation9], 0
    %s17 = scalar_lea.sflag [#allocation9], 1
    %18 = vsyncpa %s17, 0
    %19 = vsyncpa [#allocation4], 0
    %s20 = scalar_lea.sflag [#allocation4], 1
    %21 = vsyncpa %s20, 0
    loop: start=0, step=1, limit=4
    $region2: #{tpu_custom_call.1} parent=1 // loop_pre_header
      _
    $region3: #{tpu_custom_call.1} parent=1 // loop_header
      %s23 = sphi 0, %s27
      %p24 = scmp.ge.s32.totalorder %s23, 4
      %s33 = sphi 0, %s35
      %s36 = sphi 0, %s33
      %s37 = sphi 0, %s36
      %s53 = sphi 0, %s37
      %s59 = sphi 0, %s61
      %s62 = sphi 0, %s59
      %s63 = sphi 0, %s62
      %s79 = sphi 0, %s63
      %s85 = sphi 0, %s87
      %s88 = sphi 0, %s85
      %s89 = sphi 0, %s88
      %s105 = sphi 0, %s89
      %s111 = sphi 0, %s113
      %s114 = sphi 0, %s111
      %s115 = sphi 0, %s114
      %s131 = sphi 0, %s115
      %s137 = sphi 0, %s139
      %s140 = sphi 0, %s137
      %s141 = sphi 0, %s140
      %s157 = sphi 0, %s141
      %s163 = sphi 0, %s165
      %s166 = sphi 0, %s163
      %s167 = sphi 0, %s166
      %s183 = sphi 0, %s167
    $region4: #{tpu_custom_call.1} parent=1 // loop_header_branch
      %26 = sbr.rel (%p24) target = $region8
    $region5: #{tpu_custom_call.1} parent=1 // loop_body
      %s28 = ssub.s32 %s23, 1
      %s29 = ssub.s32 %s23, 2
      %s30 = sadd.s32 %s23, 1
      %s31 = ssub.s32 %s23, %s30
      %p32 = scmp.eq.s32.totalorder %s31, 0
      %s34 = sadd.s32 %s33, 1
      %s35 = scalar_select %p32, %s33, %s34
      %p38 = pneg %p32
      %p39 = scmp.eq.s32.totalorder %s23, 1
      %p40 = por %p38, %p39
      %p41 = scmp.ne.s32.totalorder %s33, %s36
      %p42 = scmp.eq.s32.totalorder %s23, 0
      %p43 = por %p41, %p42
      %p44 = scmp.ne.s32.totalorder %s33, %s36
      %p45 = scmp.eq.s32.totalorder %s28, 1
      %p46 = por %p44, %p45
      %p47 = scmp.ne.s32.totalorder %s36, %s37
      %p48 = scmp.eq.s32.totalorder %s28, 0
      %p49 = por %p47, %p48
      %p50 = scmp.ne.s32.totalorder %s36, %s37
      %p51 = scmp.eq.s32.totalorder %s29, 1
      %p52 = por %p50, %p51
      %p54 = scmp.ne.s32.totalorder %s37, %s53
      %p55 = scmp.eq.s32.totalorder %s29, 0
      %p56 = por %p54, %p55
      %s57 = ssub.s32 %s23, %s30
      %p58 = scmp.eq.s32.totalorder %s57, 0
      %s60 = sadd.s32 %s59, 1
      %s61 = scalar_select %p58, %s59, %s60
      %p64 = pneg %p58
      %p65 = scmp.eq.s32.totalorder %s23, 1
      %p66 = por %p64, %p65
      %p67 = scmp.ne.s32.totalorder %s59, %s62
      %p68 = scmp.eq.s32.totalorder %s23, 0
      %p69 = por %p67, %p68
      %p70 = scmp.ne.s32.totalorder %s59, %s62
      %p71 = scmp.eq.s32.totalorder %s28, 1
      %p72 = por %p70, %p71
      %p73 = scmp.ne.s32.totalorder %s62, %s63
      %p74 = scmp.eq.s32.totalorder %s28, 0
      %p75 = por %p73, %p74
      %p76 = scmp.ne.s32.totalorder %s62, %s63
      %p77 = scmp.eq.s32.totalorder %s29, 1
      %p78 = por %p76, %p77
      %p80 = scmp.ne.s32.totalorder %s63, %s79
      %p81 = scmp.eq.s32.totalorder %s29, 0
      %p82 = por %p80, %p81
      %s83 = ssub.s32 %s23, %s30
      %p84 = scmp.eq.s32.totalorder %s83, 0
      %s86 = sadd.s32 %s85, 1
      %s87 = scalar_select %p84, %s85, %s86
      %p90 = pneg %p84
      %p91 = scmp.eq.s32.totalorder %s23, 1
      %p92 = por %p90, %p91
      %p93 = scmp.ne.s32.totalorder %s85, %s88
      %p94 = scmp.eq.s32.totalorder %s23, 0
      %p95 = por %p93, %p94
      %p96 = scmp.ne.s32.totalorder %s85, %s88
      %p97 = scmp.eq.s32.totalorder %s28, 1
      %p98 = por %p96, %p97
      %p99 = scmp.ne.s32.totalorder %s88, %s89
      %p100 = scmp.eq.s32.totalorder %s28, 0
      %p101 = por %p99, %p100
      %p102 = scmp.ne.s32.totalorder %s88, %s89
      %p103 = scmp.eq.s32.totalorder %s29, 1
      %p104 = por %p102, %p103
      %p106 = scmp.ne.s32.totalorder %s89, %s105
      %p107 = scmp.eq.s32.totalorder %s29, 0
      %p108 = por %p106, %p107
      %s109 = ssub.s32 %s23, %s30
      %p110 = scmp.eq.s32.totalorder %s109, 0
      %s112 = sadd.s32 %s111, 1
      %s113 = scalar_select %p110, %s111, %s112
      %p116 = pneg %p110
      %p117 = scmp.eq.s32.totalorder %s23, 1
      %p118 = por %p116, %p117
      %p119 = scmp.ne.s32.totalorder %s111, %s114
      %p120 = scmp.eq.s32.totalorder %s23, 0
      %p121 = por %p119, %p120
      %p122 = scmp.ne.s32.totalorder %s111, %s114
      %p123 = scmp.eq.s32.totalorder %s28, 1
      %p124 = por %p122, %p123
      %p125 = scmp.ne.s32.totalorder %s114, %s115
      %p126 = scmp.eq.s32.totalorder %s28, 0
      %p127 = por %p125, %p126
      %p128 = scmp.ne.s32.totalorder %s114, %s115
      %p129 = scmp.eq.s32.totalorder %s29, 1
      %p130 = por %p128, %p129
      %p132 = scmp.ne.s32.totalorder %s115, %s131
      %p133 = scmp.eq.s32.totalorder %s29, 0
      %p134 = por %p132, %p133
      %s135 = ssub.s32 %s23, %s30
      %p136 = scmp.eq.s32.totalorder %s135, 0
      %s138 = sadd.s32 %s137, 1
      %s139 = scalar_select %p136, %s137, %s138
      %p142 = pneg %p136
      %p143 = scmp.eq.s32.totalorder %s23, 1
      %p144 = por %p142, %p143
      %p145 = scmp.ne.s32.totalorder %s137, %s140
      %p146 = scmp.eq.s32.totalorder %s23, 0
      %p147 = por %p145, %p146
      %p148 = scmp.ne.s32.totalorder %s137, %s140
      %p149 = scmp.eq.s32.totalorder %s28, 1
      %p150 = por %p148, %p149
      %p151 = scmp.ne.s32.totalorder %s140, %s141
      %p152 = scmp.eq.s32.totalorder %s28, 0
      %p153 = por %p151, %p152
      %p154 = scmp.ne.s32.totalorder %s140, %s141
      %p155 = scmp.eq.s32.totalorder %s29, 1
      %p156 = por %p154, %p155
      %p158 = scmp.ne.s32.totalorder %s141, %s157
      %p159 = scmp.eq.s32.totalorder %s29, 0
      %p160 = por %p158, %p159
      %s161 = ssub.s32 %s23, %s30
      %p162 = scmp.eq.s32.totalorder %s161, 0
      %s164 = sadd.s32 %s163, 1
      %s165 = scalar_select %p162, %s163, %s164
      %p168 = pneg %p162
      %p169 = scmp.eq.s32.totalorder %s23, 1
      %p170 = por %p168, %p169
      %p171 = scmp.ne.s32.totalorder %s163, %s166
      %p172 = scmp.eq.s32.totalorder %s23, 0
      %p173 = por %p171, %p172
      %p174 = scmp.ne.s32.totalorder %s163, %s166
      %p175 = scmp.eq.s32.totalorder %s28, 1
      %p176 = por %p174, %p175
      %p177 = scmp.ne.s32.totalorder %s166, %s167
      %p178 = scmp.eq.s32.totalorder %s28, 0
      %p179 = por %p177, %p178
      %p180 = scmp.ne.s32.totalorder %s166, %s167
      %p181 = scmp.eq.s32.totalorder %s29, 1
      %p182 = por %p180, %p181
      %p184 = scmp.ne.s32.totalorder %s167, %s183
      %p185 = scmp.eq.s32.totalorder %s29, 0
      %p186 = por %p184, %p185
      %p187 = scmp.le.s32.totalorder 1, %s23
      %p188 = scmp.lt.s32.totalorder %s23, 3
      %p189 = pnand %p187, %p188
      %p190 = pneg %p189
      // Predicated region
      $region9: #{tpu_custom_call.1} parent=5 // pred_check
        _
      $region10: #{tpu_custom_call.1} parent=5 // pred_check_branch
        %192 = sbr.rel (%p189) target = $region12
      $region11: #{tpu_custom_call.1} parent=5 // pred_region
        %s193 = ssub.s32 %s23, 1
      $region12: #{tpu_custom_call.1} parent=5 // pred_fallthru
        _
      %p194 = scmp.lt.s32.totalorder %s23, 2
      // Predicated region
      $region13: #{tpu_custom_call.1} parent=5 // pred_check
        %p195 = pneg %p194
      $region14: #{tpu_custom_call.1} parent=5 // pred_check_branch
        %197 = sbr.rel (%p195) target = $region16
      $region15: #{tpu_custom_call.1} parent=5 // pred_region
        // Predicated region
        $region17: #{tpu_custom_call.1} parent=15 // pred_check
          %p198 = pneg %p43
        $region18: #{tpu_custom_call.1} parent=15 // pred_check_branch
          %200 = sbr.rel (%p198) target = $region20
        $region19: #{tpu_custom_call.1} parent=15 // pred_region
          %s201 = sand.u32 %s33, 1
          %s202 = scalar_lea.sflag [#allocation3], %s201
          %s203 = sand.u32 %s33, 1
          %s204 = smul.addr %s203, 32
          %s205 = scalar_lea.vmem [#allocation2], %s204
          %s206 = smul.u32 8, %s23
          %208 = vsyncadd %s202, 0
          %s209 = smul.addr %s206, 4
          %s210 = scalar_lea.hbm %s0, %s209
          %s211 = sshll.u32 %s210, 4
          %s212 = int_to_ptr.hbm [resolvable:$true] %s211
          %s213 = sshll.u32 %s205, 4
          %s214 = int_to_ptr.vmem [resolvable:$true] %s213
          %219 = dma.hbm_to_vmem [thread:$0]  %s212, 512, %s214, %s202, 64, 64, 4
        $region20: #{tpu_custom_call.1} parent=15 // pred_fallthru
          _
        // Predicated region
        $region21: #{tpu_custom_call.1} parent=15 // pred_check
          %p220 = pneg %p69
        $region22: #{tpu_custom_call.1} parent=15 // pred_check_branch
          %222 = sbr.rel (%p220) target = $region24
        $region23: #{tpu_custom_call.1} parent=15 // pred_region
          %s223 = sand.u32 %s23, 1
          %s224 = scalar_lea.sflag [#allocation6], %s223
          %s225 = sand.u32 %s59, 1
          %s226 = smul.addr %s225, 32
          %s227 = scalar_lea.vmem [#allocation5], %s226
          %s228 = smul.u32 8, %s23
          %230 = vsyncadd %s224, 0
          %s231 = smul.addr %s228, 4
          %s232 = scalar_lea.hbm %s1, %s231
          %s233 = sshll.u32 %s232, 4
          %s234 = int_to_ptr.hbm [resolvable:$true] %s233
          %s235 = sshll.u32 %s227, 4
          %s236 = int_to_ptr.vmem [resolvable:$true] %s235
          %241 = dma.hbm_to_vmem [thread:$0]  %s234, 512, %s236, %s224, 64, 64, 4
        $region24: #{tpu_custom_call.1} parent=15 // pred_fallthru
          _
        // Predicated region
        $region25: #{tpu_custom_call.1} parent=15 // pred_check
          %p242 = pneg %p95
        $region26: #{tpu_custom_call.1} parent=15 // pred_check_branch
          %244 = sbr.rel (%p242) target = $region28
        $region27: #{tpu_custom_call.1} parent=15 // pred_region
          %s245 = sand.u32 %s23, 1
          %s246 = scalar_lea.sflag [#allocation6], %s245
          %s247 = sand.u32 %s85, 1
          %s248 = smul.addr %s247, 1024
          %s249 = scalar_lea.vmem [#allocation7], %s248
          %s250 = smul.u32 8, %s23
          %252 = vsyncadd %s246, 0
          %s253 = smul.addr %s250, 16
          %s254 = smul.addr %s253, 8
          %s255 = scalar_lea.hbm %s2, %s254
          %s256 = sshll.u32 %s255, 4
          %s257 = int_to_ptr.hbm [resolvable:$true] %s256
          %s258 = sshll.u32 %s249, 4
          %s259 = int_to_ptr.vmem [resolvable:$true] %s258
          %264 = dma.hbm_to_vmem [thread:$0]  %s257, 16384, %s259, %s246, 128, 128, 8
        $region28: #{tpu_custom_call.1} parent=15 // pred_fallthru
          _
        // Predicated region
        $region29: #{tpu_custom_call.1} parent=15 // pred_check
          %p265 = pneg %p121
        $region30: #{tpu_custom_call.1} parent=15 // pred_check_branch
          %267 = sbr.rel (%p265) target = $region32
        $region31: #{tpu_custom_call.1} parent=15 // pred_region
          %s268 = sand.u32 %s23, 1
          %s269 = scalar_lea.sflag [#allocation9], %s268
          %s270 = sand.u32 %s111, 1
          %s271 = smul.addr %s270, 1024
          %s272 = scalar_lea.vmem [#allocation8], %s271
          %s273 = smul.u32 8, %s23
          %275 = vsyncadd %s269, 0
          %s276 = smul.addr %s273, 16
          %s277 = smul.addr %s276, 8
          %s278 = scalar_lea.hbm %s3, %s277
          %s279 = sshll.u32 %s278, 4
          %s280 = int_to_ptr.hbm [resolvable:$true] %s279
          %s281 = sshll.u32 %s272, 4
          %s282 = int_to_ptr.vmem [resolvable:$true] %s281
          %287 = dma.hbm_to_vmem [thread:$0]  %s280, 16384, %s282, %s269, 128, 128, 8
        $region32: #{tpu_custom_call.1} parent=15 // pred_fallthru
          _
        // Predicated region
        $region33: #{tpu_custom_call.1} parent=15 // pred_check
          %p288 = pneg %p147
        $region34: #{tpu_custom_call.1} parent=15 // pred_check_branch
          %290 = sbr.rel (%p288) target = $region36
        $region35: #{tpu_custom_call.1} parent=15 // pred_region
          %s291 = sand.u32 %s23, 1
          %s292 = scalar_lea.sflag [#allocation9], %s291
          %s293 = sand.u32 %s137, 1
          %s294 = smul.addr %s293, 192
          %s295 = scalar_lea.vmem [#allocation10], %s294
          %s296 = smul.u32 8, %s23
          %298 = vsyncadd %s292, 0
          %s299 = smul.addr %s296, 3
          %s300 = smul.addr %s299, 8
          %s301 = scalar_lea.hbm %s4, %s300
          %s302 = sshll.u32 %s301, 4
          %s303 = int_to_ptr.hbm [resolvable:$true] %s302
          %s304 = sshll.u32 %s295, 4
          %s305 = int_to_ptr.vmem [resolvable:$true] %s304
          %310 = dma.hbm_to_vmem [thread:$0]  %s303, 3072, %s305, %s292, 128, 128, 8
        $region36: #{tpu_custom_call.1} parent=15 // pred_fallthru
          _
      $region16: #{tpu_custom_call.1} parent=5 // pred_fallthru
        _
      %p311 = scmp.le.s32.totalorder 1, %s23
      %p312 = scmp.lt.s32.totalorder %s23, 3
      %p313 = pnand %p311, %p312
      %p314 = pneg %p313
      // Predicated region
      $region37: #{tpu_custom_call.1} parent=5 // pred_check
        _
      $region38: #{tpu_custom_call.1} parent=5 // pred_check_branch
        %316 = sbr.rel (%p313) target = $region40
      $region39: #{tpu_custom_call.1} parent=5 // pred_region
        %s317 = ssub.s32 %s23, 1
        %s318 = sand.u32 %s36, 1
        %s319 = scalar_lea.sflag [#allocation3], %s318
        %s320 = sand.u32 %s36, 1
        %s321 = smul.addr %s320, 32
        %s322 = scalar_lea.vmem [#allocation2], %s321
        // Predicated region
        $region41: #{tpu_custom_call.1} parent=39 // pred_check
          %p323 = pneg %p49
        $region42: #{tpu_custom_call.1} parent=39 // pred_check_branch
          %325 = sbr.rel (%p323) target = $region44
        $region43: #{tpu_custom_call.1} parent=39 // pred_region
          %327 = dma.done %s319, 512
        $region44: #{tpu_custom_call.1} parent=39 // pred_fallthru
          _
        %s328 = sand.u32 %s28, 1
        %s329 = scalar_lea.sflag [#allocation6], %s328
        %s330 = sand.u32 %s62, 1
        %s331 = smul.addr %s330, 32
        %s332 = scalar_lea.vmem [#allocation5], %s331
        // Predicated region
        $region45: #{tpu_custom_call.1} parent=39 // pred_check
          %p333 = pneg %p75
        $region46: #{tpu_custom_call.1} parent=39 // pred_check_branch
          %335 = sbr.rel (%p333) target = $region48
        $region47: #{tpu_custom_call.1} parent=39 // pred_region
          %337 = dma.done %s329, 512
        $region48: #{tpu_custom_call.1} parent=39 // pred_fallthru
          _
        %s338 = sand.u32 %s28, 1
        %s339 = scalar_lea.sflag [#allocation6], %s338
        %s340 = sand.u32 %s88, 1
        %s341 = smul.addr %s340, 1024
        %s342 = scalar_lea.vmem [#allocation7], %s341
        // Predicated region
        $region49: #{tpu_custom_call.1} parent=39 // pred_check
          %p343 = pneg %p101
        $region50: #{tpu_custom_call.1} parent=39 // pred_check_branch
          %345 = sbr.rel (%p343) target = $region52
        $region51: #{tpu_custom_call.1} parent=39 // pred_region
          %347 = dma.done %s339, 16384
        $region52: #{tpu_custom_call.1} parent=39 // pred_fallthru
          _
        %s348 = sand.u32 %s28, 1
        %s349 = scalar_lea.sflag [#allocation9], %s348
        %s350 = sand.u32 %s114, 1
        %s351 = smul.addr %s350, 1024
        %s352 = scalar_lea.vmem [#allocation8], %s351
        // Predicated region
        $region53: #{tpu_custom_call.1} parent=39 // pred_check
          %p353 = pneg %p127
        $region54: #{tpu_custom_call.1} parent=39 // pred_check_branch
          %355 = sbr.rel (%p353) target = $region56
        $region55: #{tpu_custom_call.1} parent=39 // pred_region
          %357 = dma.done %s349, 16384
        $region56: #{tpu_custom_call.1} parent=39 // pred_fallthru
          _
        %s358 = sand.u32 %s28, 1
        %s359 = scalar_lea.sflag [#allocation9], %s358
        %s360 = sand.u32 %s140, 1
        %s361 = smul.addr %s360, 192
        %s362 = scalar_lea.vmem [#allocation10], %s361
        // Predicated region
        $region57: #{tpu_custom_call.1} parent=39 // pred_check
          %p363 = pneg %p153
        $region58: #{tpu_custom_call.1} parent=39 // pred_check_branch
          %365 = sbr.rel (%p363) target = $region60
        $region59: #{tpu_custom_call.1} parent=39 // pred_region
          %367 = dma.done %s359, 3072
        $region60: #{tpu_custom_call.1} parent=39 // pred_fallthru
          _
        %s368 = sand.u32 %s36, 1
        %s369 = scalar_lea.sflag [#allocation3], %s368
        %s370 = sand.u32 %s36, 1
        %s371 = smul.addr %s370, 32
        %s372 = scalar_lea.vmem [#allocation2], %s371
        %p373 = pneg %p49
        %p374 = pneg %p46
        %s375 = sand.u32 %s28, 1
        %s376 = scalar_lea.sflag [#allocation6], %s375
        %s377 = sand.u32 %s62, 1
        %s378 = smul.addr %s377, 32
        %s379 = scalar_lea.vmem [#allocation5], %s378
        %p380 = pneg %p75
        %p381 = pneg %p72
        %s382 = sand.u32 %s28, 1
        %s383 = scalar_lea.sflag [#allocation6], %s382
        %s384 = sand.u32 %s88, 1
        %s385 = smul.addr %s384, 1024
        %s386 = scalar_lea.vmem [#allocation7], %s385
        %p387 = pneg %p101
        %p388 = pneg %p98
        %s389 = sand.u32 %s28, 1
        %s390 = scalar_lea.sflag [#allocation9], %s389
        %s391 = sand.u32 %s114, 1
        %s392 = smul.addr %s391, 1024
        %s393 = scalar_lea.vmem [#allocation8], %s392
        %p394 = pneg %p127
        %p395 = pneg %p124
        %s396 = sand.u32 %s28, 1
        %s397 = scalar_lea.sflag [#allocation9], %s396
        %s398 = sand.u32 %s140, 1
        %s399 = smul.addr %s398, 192
        %s400 = scalar_lea.vmem [#allocation10], %s399
        %p401 = pneg %p153
        %p402 = pneg %p150
        %p403 = pneg %p179
        %p404 = pneg %p176
        %s405 = sand.u32 %s166, 1
        %s406 = scalar_lea.sflag [#allocation4], %s405
        %s407 = sand.u32 %s166, 1
        %s408 = smul.addr %s407, 8
        %s409 = scalar_lea.vmem [#allocation11], %s408
        %s410 = smul.u32 8, %s28
        %s411 = smul.u32 8, %s28
        %s412 = smul.u32 8, %s28
        %s413 = smul.u32 8, %s28
        %s414 = smul.u32 8, %s28
        %v415 = vld [vmem:[%s322] sm:$0xf]
        %v416 = vld [vmem:[%s322 + $0x4] sm:$0xf]
        %v417 = vld [vmem:[%s322 + $0x8] sm:$0xf]
        %v418 = vld [vmem:[%s322 + $0xc] sm:$0xf]
        %v419 = vld [vmem:[%s322 + $0x10] sm:$0xf]
        %v420 = vld [vmem:[%s322 + $0x14] sm:$0xf]
        %v421 = vld [vmem:[%s322 + $0x18] sm:$0xf]
        %v422 = vld [vmem:[%s322 + $0x1c] sm:$0xf]
        %v423 = vld [vmem:[%s332] sm:$0xf]
        %v424 = vld [vmem:[%s332 + $0x4] sm:$0xf]
        %v425 = vld [vmem:[%s332 + $0x8] sm:$0xf]
        %v426 = vld [vmem:[%s332 + $0xc] sm:$0xf]
        %v427 = vld [vmem:[%s332 + $0x10] sm:$0xf]
        %v428 = vld [vmem:[%s332 + $0x14] sm:$0xf]
        %v429 = vld [vmem:[%s332 + $0x18] sm:$0xf]
        %v430 = vld [vmem:[%s332 + $0x1c] sm:$0xf]
        %v432 = vrot.slane %v415, 3
        %vm433 = vcmask 31744
        %v434 = vsel %vm433, %v432, 0
        %vm436 = vcmask 1043456
        %v438 = vsel %vm436, %v423, 0
        %440 = vmatpush.msra.mxu0 0.0
        %441 = vmatpush.msra.mxu0 0.0
        %442 = vmatpush.msra.mxu0 0.0
        %443 = vmatpush.msra.mxu0 0.0
        %444 = vmatpush.msra.mxu0 0.0
        %445 = vmatpush.msra.mxu0 0.0
        %446 = vmatpush.msra.mxu0 0.0
        %447 = vmatpush.msra.mxu0 0.0
        %448 = vmatpush.msra.mxu0 0.0
        %449 = vmatpush.msra.mxu0 0.0
        %450 = vmatpush.msra.mxu0 0.0
        %451 = vmatpush.msra.mxu0 0.0
        %452 = vmatpush.msra.mxu0 0.0
        %453 = vmatpush.msra.mxu0 0.0
        %454 = vmatpush.msra.mxu0 0.0
        %455 = vmatpush.msra.mxu0 %v438
        %456 = vmatmul.f32.gmra.mxu0 %v434
        %v457 = vpop.f32.mrf.mxu0
        %v458 = vadd.f32 %v415, %v457
        %459 = vdwg.mxu0
        %v461 = vrot.slane %v416, 3
        %v462 = vsel %vm433, %v461, 0
        %v465 = vsel %vm436, %v424, 0
        %467 = vmatpush.msra.mxu0 0.0
        %468 = vmatpush.msra.mxu0 0.0
        %469 = vmatpush.msra.mxu0 0.0
        %470 = vmatpush.msra.mxu0 0.0
        %471 = vmatpush.msra.mxu0 0.0
        %472 = vmatpush.msra.mxu0 0.0
        %473 = vmatpush.msra.mxu0 0.0
        %474 = vmatpush.msra.mxu0 0.0
        %475 = vmatpush.msra.mxu0 0.0
        %476 = vmatpush.msra.mxu0 0.0
        %477 = vmatpush.msra.mxu0 0.0
        %478 = vmatpush.msra.mxu0 0.0
        %479 = vmatpush.msra.mxu0 0.0
        %480 = vmatpush.msra.mxu0 0.0
        %481 = vmatpush.msra.mxu0 0.0
        %482 = vmatpush.msra.mxu0 %v465
        %483 = vmatmul.f32.gmra.mxu0 %v462
        %v484 = vpop.f32.mrf.mxu0
        %v485 = vadd.f32 %v416, %v484
        %486 = vdwg.mxu0
        %v488 = vrot.slane %v417, 3
        %v489 = vsel %vm433, %v488, 0
        %v492 = vsel %vm436, %v425, 0
        %494 = vmatpush.msra.mxu0 0.0
        %495 = vmatpush.msra.mxu0 0.0
        %496 = vmatpush.msra.mxu0 0.0
        %497 = vmatpush.msra.mxu0 0.0
        %498 = vmatpush.msra.mxu0 0.0
        %499 = vmatpush.msra.mxu0 0.0
        %500 = vmatpush.msra.mxu0 0.0
        %501 = vmatpush.msra.mxu0 0.0
        %502 = vmatpush.msra.mxu0 0.0
        %503 = vmatpush.msra.mxu0 0.0
        %504 = vmatpush.msra.mxu0 0.0
        %505 = vmatpush.msra.mxu0 0.0
        %506 = vmatpush.msra.mxu0 0.0
        %507 = vmatpush.msra.mxu0 0.0
        %508 = vmatpush.msra.mxu0 0.0
        %509 = vmatpush.msra.mxu0 %v492
        %510 = vmatmul.f32.gmra.mxu0 %v489
        %v511 = vpop.f32.mrf.mxu0
        %v512 = vadd.f32 %v417, %v511
        %513 = vdwg.mxu0
        %v515 = vrot.slane %v418, 3
        %v516 = vsel %vm433, %v515, 0
        %v519 = vsel %vm436, %v426, 0
        %521 = vmatpush.msra.mxu0 0.0
        %522 = vmatpush.msra.mxu0 0.0
        %523 = vmatpush.msra.mxu0 0.0
        %524 = vmatpush.msra.mxu0 0.0
        %525 = vmatpush.msra.mxu0 0.0
        %526 = vmatpush.msra.mxu0 0.0
        %527 = vmatpush.msra.mxu0 0.0
        %528 = vmatpush.msra.mxu0 0.0
        %529 = vmatpush.msra.mxu0 0.0
        %530 = vmatpush.msra.mxu0 0.0
        %531 = vmatpush.msra.mxu0 0.0
        %532 = vmatpush.msra.mxu0 0.0
        %533 = vmatpush.msra.mxu0 0.0
        %534 = vmatpush.msra.mxu0 0.0
        %535 = vmatpush.msra.mxu0 0.0
        %536 = vmatpush.msra.mxu0 %v519
        %537 = vmatmul.f32.gmra.mxu0 %v516
        %v538 = vpop.f32.mrf.mxu0
        %v539 = vadd.f32 %v418, %v538
        %540 = vdwg.mxu0
        %v542 = vrot.slane %v419, 3
        %v543 = vsel %vm433, %v542, 0
        %v546 = vsel %vm436, %v427, 0
        %548 = vmatpush.msra.mxu0 0.0
        %549 = vmatpush.msra.mxu0 0.0
        %550 = vmatpush.msra.mxu0 0.0
        %551 = vmatpush.msra.mxu0 0.0
        %552 = vmatpush.msra.mxu0 0.0
        %553 = vmatpush.msra.mxu0 0.0
        %554 = vmatpush.msra.mxu0 0.0
        %555 = vmatpush.msra.mxu0 0.0
        %556 = vmatpush.msra.mxu0 0.0
        %557 = vmatpush.msra.mxu0 0.0
        %558 = vmatpush.msra.mxu0 0.0
        %559 = vmatpush.msra.mxu0 0.0
        %560 = vmatpush.msra.mxu0 0.0
        %561 = vmatpush.msra.mxu0 0.0
        %562 = vmatpush.msra.mxu0 0.0
        %563 = vmatpush.msra.mxu0 %v546
        %564 = vmatmul.f32.gmra.mxu0 %v543
        %v565 = vpop.f32.mrf.mxu0
        %v566 = vadd.f32 %v419, %v565
        %567 = vdwg.mxu0
        %v569 = vrot.slane %v420, 3
        %v570 = vsel %vm433, %v569, 0
        %v573 = vsel %vm436, %v428, 0
        %575 = vmatpush.msra.mxu0 0.0
        %576 = vmatpush.msra.mxu0 0.0
        %577 = vmatpush.msra.mxu0 0.0
        %578 = vmatpush.msra.mxu0 0.0
        %579 = vmatpush.msra.mxu0 0.0
        %580 = vmatpush.msra.mxu0 0.0
        %581 = vmatpush.msra.mxu0 0.0
        %582 = vmatpush.msra.mxu0 0.0
        %583 = vmatpush.msra.mxu0 0.0
        %584 = vmatpush.msra.mxu0 0.0
        %585 = vmatpush.msra.mxu0 0.0
        %586 = vmatpush.msra.mxu0 0.0
        %587 = vmatpush.msra.mxu0 0.0
        %588 = vmatpush.msra.mxu0 0.0
        %589 = vmatpush.msra.mxu0 0.0
        %590 = vmatpush.msra.mxu0 %v573
        %591 = vmatmul.f32.gmra.mxu0 %v570
        %v592 = vpop.f32.mrf.mxu0
        %v593 = vadd.f32 %v420, %v592
        %594 = vdwg.mxu0
        %v596 = vrot.slane %v421, 3
        %v597 = vsel %vm433, %v596, 0
        %v600 = vsel %vm436, %v429, 0
        %602 = vmatpush.msra.mxu0 0.0
        %603 = vmatpush.msra.mxu0 0.0
        %604 = vmatpush.msra.mxu0 0.0
        %605 = vmatpush.msra.mxu0 0.0
        %606 = vmatpush.msra.mxu0 0.0
        %607 = vmatpush.msra.mxu0 0.0
        %608 = vmatpush.msra.mxu0 0.0
        %609 = vmatpush.msra.mxu0 0.0
        %610 = vmatpush.msra.mxu0 0.0
        %611 = vmatpush.msra.mxu0 0.0
        %612 = vmatpush.msra.mxu0 0.0
        %613 = vmatpush.msra.mxu0 0.0
        %614 = vmatpush.msra.mxu0 0.0
        %615 = vmatpush.msra.mxu0 0.0
        %616 = vmatpush.msra.mxu0 0.0
        %617 = vmatpush.msra.mxu0 %v600
        %618 = vmatmul.f32.gmra.mxu0 %v597
        %v619 = vpop.f32.mrf.mxu0
        %v620 = vadd.f32 %v421, %v619
        %621 = vdwg.mxu0
        %v623 = vrot.slane %v422, 3
        %v624 = vsel %vm433, %v623, 0
        %v627 = vsel %vm436, %v430, 0
        %629 = vmatpush.msra.mxu0 0.0
        %630 = vmatpush.msra.mxu0 0.0
        %631 = vmatpush.msra.mxu0 0.0
        %632 = vmatpush.msra.mxu0 0.0
        %633 = vmatpush.msra.mxu0 0.0
        %634 = vmatpush.msra.mxu0 0.0
        %635 = vmatpush.msra.mxu0 0.0
        %636 = vmatpush.msra.mxu0 0.0
        %637 = vmatpush.msra.mxu0 0.0
        %638 = vmatpush.msra.mxu0 0.0
        %639 = vmatpush.msra.mxu0 0.0
        %640 = vmatpush.msra.mxu0 0.0
        %641 = vmatpush.msra.mxu0 0.0
        %642 = vmatpush.msra.mxu0 0.0
        %643 = vmatpush.msra.mxu0 0.0
        %644 = vmatpush.msra.mxu0 %v627
        %645 = vmatmul.f32.gmra.mxu0 %v624
        %v646 = vpop.f32.mrf.mxu0
        %v647 = vadd.f32 %v422, %v646
        %648 = vdwg.mxu0
        %v649 = vmax.f32 %v458, 0.0
        %v650 = vmax.f32 %v485, 0.0
        %v651 = vmax.f32 %v512, 0.0
        %v652 = vmax.f32 %v539, 0.0
        %v653 = vmax.f32 %v566, 0.0
        %v654 = vmax.f32 %v593, 0.0
        %v655 = vmax.f32 %v620, 0.0
        %v656 = vmax.f32 %v647, 0.0
        %v657 = vld [vmem:[%s342] sm:$0xff]
        %v658 = vld [vmem:[%s342 + $0x8] sm:$0xff]
        %v659 = vld [vmem:[%s342 + $0x10] sm:$0xff]
        %v660 = vld [vmem:[%s342 + $0x18] sm:$0xff]
        %v661 = vld [vmem:[%s342 + $0x20] sm:$0xff]
        %v662 = vld [vmem:[%s342 + $0x28] sm:$0xff]
        %v663 = vld [vmem:[%s342 + $0x30] sm:$0xff]
        %v664 = vld [vmem:[%s342 + $0x38] sm:$0xff]
        %v665 = vld [vmem:[%s342 + $0x40] sm:$0xff]
        %v666 = vld [vmem:[%s342 + $0x48] sm:$0xff]
        %v667 = vld [vmem:[%s342 + $0x50] sm:$0xff]
        %v668 = vld [vmem:[%s342 + $0x58] sm:$0xff]
        %v669 = vld [vmem:[%s342 + $0x60] sm:$0xff]
        %v670 = vld [vmem:[%s342 + $0x68] sm:$0xff]
        %v671 = vld [vmem:[%s342 + $0x70] sm:$0xff]
        %v672 = vld [vmem:[%s342 + $0x78] sm:$0xff]
        %v673 = vld [vmem:[%s342 + $0x80] sm:$0xff]
        %v674 = vld [vmem:[%s342 + $0x88] sm:$0xff]
        %v675 = vld [vmem:[%s342 + $0x90] sm:$0xff]
        %v676 = vld [vmem:[%s342 + $0x98] sm:$0xff]
        %v677 = vld [vmem:[%s342 + $0xa0] sm:$0xff]
        %v678 = vld [vmem:[%s342 + $0xa8] sm:$0xff]
        %v679 = vld [vmem:[%s342 + $0xb0] sm:$0xff]
        %v680 = vld [vmem:[%s342 + $0xb8] sm:$0xff]
        %v681 = vld [vmem:[%s342 + $0xc0] sm:$0xff]
        %v682 = vld [vmem:[%s342 + $0xc8] sm:$0xff]
        %v683 = vld [vmem:[%s342 + $0xd0] sm:$0xff]
        %v684 = vld [vmem:[%s342 + $0xd8] sm:$0xff]
        %v685 = vld [vmem:[%s342 + $0xe0] sm:$0xff]
        %v686 = vld [vmem:[%s342 + $0xe8] sm:$0xff]
        %v687 = vld [vmem:[%s342 + $0xf0] sm:$0xff]
        %v688 = vld [vmem:[%s342 + $0xf8] sm:$0xff]
        %v689 = vld [vmem:[%s342 + $0x100] sm:$0xff]
        %v690 = vld [vmem:[%s342 + $0x108] sm:$0xff]
        %v691 = vld [vmem:[%s342 + $0x110] sm:$0xff]
        %v692 = vld [vmem:[%s342 + $0x118] sm:$0xff]
        %v693 = vld [vmem:[%s342 + $0x120] sm:$0xff]
        %v694 = vld [vmem:[%s342 + $0x128] sm:$0xff]
        %v695 = vld [vmem:[%s342 + $0x130] sm:$0xff]
        %v696 = vld [vmem:[%s342 + $0x138] sm:$0xff]
        %v697 = vld [vmem:[%s342 + $0x140] sm:$0xff]
        %v698 = vld [vmem:[%s342 + $0x148] sm:$0xff]
        %v699 = vld [vmem:[%s342 + $0x150] sm:$0xff]
        %v700 = vld [vmem:[%s342 + $0x158] sm:$0xff]
        %v701 = vld [vmem:[%s342 + $0x160] sm:$0xff]
        %v702 = vld [vmem:[%s342 + $0x168] sm:$0xff]
        %v703 = vld [vmem:[%s342 + $0x170] sm:$0xff]
        %v704 = vld [vmem:[%s342 + $0x178] sm:$0xff]
        %v705 = vld [vmem:[%s342 + $0x180] sm:$0xff]
        %v706 = vld [vmem:[%s342 + $0x188] sm:$0xff]
        %v707 = vld [vmem:[%s342 + $0x190] sm:$0xff]
        %v708 = vld [vmem:[%s342 + $0x198] sm:$0xff]
        %v709 = vld [vmem:[%s342 + $0x1a0] sm:$0xff]
        %v710 = vld [vmem:[%s342 + $0x1a8] sm:$0xff]
        %v711 = vld [vmem:[%s342 + $0x1b0] sm:$0xff]
        %v712 = vld [vmem:[%s342 + $0x1b8] sm:$0xff]
        %v713 = vld [vmem:[%s342 + $0x1c0] sm:$0xff]
        %v714 = vld [vmem:[%s342 + $0x1c8] sm:$0xff]
        %v715 = vld [vmem:[%s342 + $0x1d0] sm:$0xff]
        %v716 = vld [vmem:[%s342 + $0x1d8] sm:$0xff]
        %v717 = vld [vmem:[%s342 + $0x1e0] sm:$0xff]
        %v718 = vld [vmem:[%s342 + $0x1e8] sm:$0xff]
        %v719 = vld [vmem:[%s342 + $0x1f0] sm:$0xff]
        %v720 = vld [vmem:[%s342 + $0x1f8] sm:$0xff]
        %v721 = vld [vmem:[%s342 + $0x200] sm:$0xff]
        %v722 = vld [vmem:[%s342 + $0x208] sm:$0xff]
        %v723 = vld [vmem:[%s342 + $0x210] sm:$0xff]
        %v724 = vld [vmem:[%s342 + $0x218] sm:$0xff]
        %v725 = vld [vmem:[%s342 + $0x220] sm:$0xff]
        %v726 = vld [vmem:[%s342 + $0x228] sm:$0xff]
        %v727 = vld [vmem:[%s342 + $0x230] sm:$0xff]
        %v728 = vld [vmem:[%s342 + $0x238] sm:$0xff]
        %v729 = vld [vmem:[%s342 + $0x240] sm:$0xff]
        %v730 = vld [vmem:[%s342 + $0x248] sm:$0xff]
        %v731 = vld [vmem:[%s342 + $0x250] sm:$0xff]
        %v732 = vld [vmem:[%s342 + $0x258] sm:$0xff]
        %v733 = vld [vmem:[%s342 + $0x260] sm:$0xff]
        %v734 = vld [vmem:[%s342 + $0x268] sm:$0xff]
        %v735 = vld [vmem:[%s342 + $0x270] sm:$0xff]
        %v736 = vld [vmem:[%s342 + $0x278] sm:$0xff]
        %v737 = vld [vmem:[%s342 + $0x280] sm:$0xff]
        %v738 = vld [vmem:[%s342 + $0x288] sm:$0xff]
        %v739 = vld [vmem:[%s342 + $0x290] sm:$0xff]
        %v740 = vld [vmem:[%s342 + $0x298] sm:$0xff]
        %v741 = vld [vmem:[%s342 + $0x2a0] sm:$0xff]
        %v742 = vld [vmem:[%s342 + $0x2a8] sm:$0xff]
        %v743 = vld [vmem:[%s342 + $0x2b0] sm:$0xff]
        %v744 = vld [vmem:[%s342 + $0x2b8] sm:$0xff]
        %v745 = vld [vmem:[%s342 + $0x2c0] sm:$0xff]
        %v746 = vld [vmem:[%s342 + $0x2c8] sm:$0xff]
        %v747 = vld [vmem:[%s342 + $0x2d0] sm:$0xff]
        %v748 = vld [vmem:[%s342 + $0x2d8] sm:$0xff]
        %v749 = vld [vmem:[%s342 + $0x2e0] sm:$0xff]
        %v750 = vld [vmem:[%s342 + $0x2e8] sm:$0xff]
        %v751 = vld [vmem:[%s342 + $0x2f0] sm:$0xff]
        %v752 = vld [vmem:[%s342 + $0x2f8] sm:$0xff]
        %v753 = vld [vmem:[%s342 + $0x300] sm:$0xff]
        %v754 = vld [vmem:[%s342 + $0x308] sm:$0xff]
        %v755 = vld [vmem:[%s342 + $0x310] sm:$0xff]
        %v756 = vld [vmem:[%s342 + $0x318] sm:$0xff]
        %v757 = vld [vmem:[%s342 + $0x320] sm:$0xff]
        %v758 = vld [vmem:[%s342 + $0x328] sm:$0xff]
        %v759 = vld [vmem:[%s342 + $0x330] sm:$0xff]
        %v760 = vld [vmem:[%s342 + $0x338] sm:$0xff]
        %v761 = vld [vmem:[%s342 + $0x340] sm:$0xff]
        %v762 = vld [vmem:[%s342 + $0x348] sm:$0xff]
        %v763 = vld [vmem:[%s342 + $0x350] sm:$0xff]
        %v764 = vld [vmem:[%s342 + $0x358] sm:$0xff]
        %v765 = vld [vmem:[%s342 + $0x360] sm:$0xff]
        %v766 = vld [vmem:[%s342 + $0x368] sm:$0xff]
        %v767 = vld [vmem:[%s342 + $0x370] sm:$0xff]
        %v768 = vld [vmem:[%s342 + $0x378] sm:$0xff]
        %v769 = vld [vmem:[%s342 + $0x380] sm:$0xff]
        %v770 = vld [vmem:[%s342 + $0x388] sm:$0xff]
        %v771 = vld [vmem:[%s342 + $0x390] sm:$0xff]
        %v772 = vld [vmem:[%s342 + $0x398] sm:$0xff]
        %v773 = vld [vmem:[%s342 + $0x3a0] sm:$0xff]
        %v774 = vld [vmem:[%s342 + $0x3a8] sm:$0xff]
        %v775 = vld [vmem:[%s342 + $0x3b0] sm:$0xff]
        %v776 = vld [vmem:[%s342 + $0x3b8] sm:$0xff]
        %v777 = vld [vmem:[%s342 + $0x3c0] sm:$0xff]
        %v778 = vld [vmem:[%s342 + $0x3c8] sm:$0xff]
        %v779 = vld [vmem:[%s342 + $0x3d0] sm:$0xff]
        %v780 = vld [vmem:[%s342 + $0x3d8] sm:$0xff]
        %v781 = vld [vmem:[%s342 + $0x3e0] sm:$0xff]
        %v782 = vld [vmem:[%s342 + $0x3e8] sm:$0xff]
        %v783 = vld [vmem:[%s342 + $0x3f0] sm:$0xff]
        %v784 = vld [vmem:[%s342 + $0x3f8] sm:$0xff]
        %v785 = vrot.slane %v415, 1
        %787 = vmatpush.xpose.msra.mxu0 %v672
        %788 = vmatpush.xpose.msra.mxu0 %v671
        %789 = vmatpush.xpose.msra.mxu0 %v670
        %790 = vmatpush.xpose.msra.mxu0 %v669
        %791 = vmatpush.xpose.msra.mxu0 %v668
        %792 = vmatpush.xpose.msra.mxu0 %v667
        %793 = vmatpush.xpose.msra.mxu0 %v666
        %794 = vmatpush.xpose.msra.mxu0 %v665
        %795 = vmatpush.xpose.msra.mxu0 %v664
        %796 = vmatpush.xpose.msra.mxu0 %v663
        %797 = vmatpush.xpose.msra.mxu0 %v662
        %798 = vmatpush.xpose.msra.mxu0 %v661
        %799 = vmatpush.xpose.msra.mxu0 %v660
        %800 = vmatpush.xpose.msra.mxu0 %v659
        %801 = vmatpush.xpose.msra.mxu0 %v658
        %802 = vmatpush.xpose.msra.mxu0 %v657
        %803 = vmatmul.f32.gmra.mxu0 %v649
        %v804 = vpop.f32.mrf.mxu0
        %v805 = vadd.f32 %v785, %v804
        %806 = vdwg.mxu0
        %v807 = vrot.slane %v416, 1
        %809 = vmatpush.xpose.msra.mxu0 %v688
        %810 = vmatpush.xpose.msra.mxu0 %v687
        %811 = vmatpush.xpose.msra.mxu0 %v686
        %812 = vmatpush.xpose.msra.mxu0 %v685
        %813 = vmatpush.xpose.msra.mxu0 %v684
        %814 = vmatpush.xpose.msra.mxu0 %v683
        %815 = vmatpush.xpose.msra.mxu0 %v682
        %816 = vmatpush.xpose.msra.mxu0 %v681
        %817 = vmatpush.xpose.msra.mxu0 %v680
        %818 = vmatpush.xpose.msra.mxu0 %v679
        %819 = vmatpush.xpose.msra.mxu0 %v678
        %820 = vmatpush.xpose.msra.mxu0 %v677
        %821 = vmatpush.xpose.msra.mxu0 %v676
        %822 = vmatpush.xpose.msra.mxu0 %v675
        %823 = vmatpush.xpose.msra.mxu0 %v674
        %824 = vmatpush.xpose.msra.mxu0 %v673
        %825 = vmatmul.f32.gmra.mxu0 %v650
        %v826 = vpop.f32.mrf.mxu0
        %v827 = vadd.f32 %v807, %v826
        %828 = vdwg.mxu0
        %v829 = vrot.slane %v417, 1
        %831 = vmatpush.xpose.msra.mxu0 %v704
        %832 = vmatpush.xpose.msra.mxu0 %v703
        %833 = vmatpush.xpose.msra.mxu0 %v702
        %834 = vmatpush.xpose.msra.mxu0 %v701
        %835 = vmatpush.xpose.msra.mxu0 %v700
        %836 = vmatpush.xpose.msra.mxu0 %v699
        %837 = vmatpush.xpose.msra.mxu0 %v698
        %838 = vmatpush.xpose.msra.mxu0 %v697
        %839 = vmatpush.xpose.msra.mxu0 %v696
        %840 = vmatpush.xpose.msra.mxu0 %v695
        %841 = vmatpush.xpose.msra.mxu0 %v694
        %842 = vmatpush.xpose.msra.mxu0 %v693
        %843 = vmatpush.xpose.msra.mxu0 %v692
        %844 = vmatpush.xpose.msra.mxu0 %v691
        %845 = vmatpush.xpose.msra.mxu0 %v690
        %846 = vmatpush.xpose.msra.mxu0 %v689
        %847 = vmatmul.f32.gmra.mxu0 %v651
        %v848 = vpop.f32.mrf.mxu0
        %v849 = vadd.f32 %v829, %v848
        %850 = vdwg.mxu0
        %v851 = vrot.slane %v418, 1
        %853 = vmatpush.xpose.msra.mxu0 %v720
        %854 = vmatpush.xpose.msra.mxu0 %v719
        %855 = vmatpush.xpose.msra.mxu0 %v718
        %856 = vmatpush.xpose.msra.mxu0 %v717
        %857 = vmatpush.xpose.msra.mxu0 %v716
        %858 = vmatpush.xpose.msra.mxu0 %v715
        %859 = vmatpush.xpose.msra.mxu0 %v714
        %860 = vmatpush.xpose.msra.mxu0 %v713
        %861 = vmatpush.xpose.msra.mxu0 %v712
        %862 = vmatpush.xpose.msra.mxu0 %v711
        %863 = vmatpush.xpose.msra.mxu0 %v710
        %864 = vmatpush.xpose.msra.mxu0 %v709
        %865 = vmatpush.xpose.msra.mxu0 %v708
        %866 = vmatpush.xpose.msra.mxu0 %v707
        %867 = vmatpush.xpose.msra.mxu0 %v706
        %868 = vmatpush.xpose.msra.mxu0 %v705
        %869 = vmatmul.f32.gmra.mxu0 %v652
        %v870 = vpop.f32.mrf.mxu0
        %v871 = vadd.f32 %v851, %v870
        %872 = vdwg.mxu0
        %v873 = vrot.slane %v419, 1
        %875 = vmatpush.xpose.msra.mxu0 %v736
        %876 = vmatpush.xpose.msra.mxu0 %v735
        %877 = vmatpush.xpose.msra.mxu0 %v734
        %878 = vmatpush.xpose.msra.mxu0 %v733
        %879 = vmatpush.xpose.msra.mxu0 %v732
        %880 = vmatpush.xpose.msra.mxu0 %v731
        %881 = vmatpush.xpose.msra.mxu0 %v730
        %882 = vmatpush.xpose.msra.mxu0 %v729
        %883 = vmatpush.xpose.msra.mxu0 %v728
        %884 = vmatpush.xpose.msra.mxu0 %v727
        %885 = vmatpush.xpose.msra.mxu0 %v726
        %886 = vmatpush.xpose.msra.mxu0 %v725
        %887 = vmatpush.xpose.msra.mxu0 %v724
        %888 = vmatpush.xpose.msra.mxu0 %v723
        %889 = vmatpush.xpose.msra.mxu0 %v722
        %890 = vmatpush.xpose.msra.mxu0 %v721
        %891 = vmatmul.f32.gmra.mxu0 %v653
        %v892 = vpop.f32.mrf.mxu0
        %v893 = vadd.f32 %v873, %v892
        %894 = vdwg.mxu0
        %v895 = vrot.slane %v420, 1
        %897 = vmatpush.xpose.msra.mxu0 %v752
        %898 = vmatpush.xpose.msra.mxu0 %v751
        %899 = vmatpush.xpose.msra.mxu0 %v750
        %900 = vmatpush.xpose.msra.mxu0 %v749
        %901 = vmatpush.xpose.msra.mxu0 %v748
        %902 = vmatpush.xpose.msra.mxu0 %v747
        %903 = vmatpush.xpose.msra.mxu0 %v746
        %904 = vmatpush.xpose.msra.mxu0 %v745
        %905 = vmatpush.xpose.msra.mxu0 %v744
        %906 = vmatpush.xpose.msra.mxu0 %v743
        %907 = vmatpush.xpose.msra.mxu0 %v742
        %908 = vmatpush.xpose.msra.mxu0 %v741
        %909 = vmatpush.xpose.msra.mxu0 %v740
        %910 = vmatpush.xpose.msra.mxu0 %v739
        %911 = vmatpush.xpose.msra.mxu0 %v738
        %912 = vmatpush.xpose.msra.mxu0 %v737
        %913 = vmatmul.f32.gmra.mxu0 %v654
        %v914 = vpop.f32.mrf.mxu0
        %v915 = vadd.f32 %v895, %v914
        %916 = vdwg.mxu0
        %v917 = vrot.slane %v421, 1
        %919 = vmatpush.xpose.msra.mxu0 %v768
        %920 = vmatpush.xpose.msra.mxu0 %v767
        %921 = vmatpush.xpose.msra.mxu0 %v766
        %922 = vmatpush.xpose.msra.mxu0 %v765
        %923 = vmatpush.xpose.msra.mxu0 %v764
        %924 = vmatpush.xpose.msra.mxu0 %v763
        %925 = vmatpush.xpose.msra.mxu0 %v762
        %926 = vmatpush.xpose.msra.mxu0 %v761
        %927 = vmatpush.xpose.msra.mxu0 %v760
        %928 = vmatpush.xpose.msra.mxu0 %v759
        %929 = vmatpush.xpose.msra.mxu0 %v758
        %930 = vmatpush.xpose.msra.mxu0 %v757
        %931 = vmatpush.xpose.msra.mxu0 %v756
        %932 = vmatpush.xpose.msra.mxu0 %v755
        %933 = vmatpush.xpose.msra.mxu0 %v754
        %934 = vmatpush.xpose.msra.mxu0 %v753
        %935 = vmatmul.f32.gmra.mxu0 %v655
        %v936 = vpop.f32.mrf.mxu0
        %v937 = vadd.f32 %v917, %v936
        %938 = vdwg.mxu0
        %v939 = vrot.slane %v422, 1
        %941 = vmatpush.xpose.msra.mxu0 %v784
        %942 = vmatpush.xpose.msra.mxu0 %v783
        %943 = vmatpush.xpose.msra.mxu0 %v782
        %944 = vmatpush.xpose.msra.mxu0 %v781
        %945 = vmatpush.xpose.msra.mxu0 %v780
        %946 = vmatpush.xpose.msra.mxu0 %v779
        %947 = vmatpush.xpose.msra.mxu0 %v778
        %948 = vmatpush.xpose.msra.mxu0 %v777
        %949 = vmatpush.xpose.msra.mxu0 %v776
        %950 = vmatpush.xpose.msra.mxu0 %v775
        %951 = vmatpush.xpose.msra.mxu0 %v774
        %952 = vmatpush.xpose.msra.mxu0 %v773
        %953 = vmatpush.xpose.msra.mxu0 %v772
        %954 = vmatpush.xpose.msra.mxu0 %v771
        %955 = vmatpush.xpose.msra.mxu0 %v770
        %956 = vmatpush.xpose.msra.mxu0 %v769
        %957 = vmatmul.f32.gmra.mxu0 %v656
        %v958 = vpop.f32.mrf.mxu0
        %v959 = vadd.f32 %v939, %v958
        %960 = vdwg.mxu0
        %v961 = vmax.f32 %v805, 0.0
        %v962 = vmax.f32 %v827, 0.0
        %v963 = vmax.f32 %v849, 0.0
        %v964 = vmax.f32 %v871, 0.0
        %v965 = vmax.f32 %v893, 0.0
        %v966 = vmax.f32 %v915, 0.0
        %v967 = vmax.f32 %v937, 0.0
        %v968 = vmax.f32 %v959, 0.0
        %v969 = vld [vmem:[%s352] sm:$0xff]
        %v970 = vld [vmem:[%s352 + $0x8] sm:$0xff]
        %v971 = vld [vmem:[%s352 + $0x10] sm:$0xff]
        %v972 = vld [vmem:[%s352 + $0x18] sm:$0xff]
        %v973 = vld [vmem:[%s352 + $0x20] sm:$0xff]
        %v974 = vld [vmem:[%s352 + $0x28] sm:$0xff]
        %v975 = vld [vmem:[%s352 + $0x30] sm:$0xff]
        %v976 = vld [vmem:[%s352 + $0x38] sm:$0xff]
        %v977 = vld [vmem:[%s352 + $0x40] sm:$0xff]
        %v978 = vld [vmem:[%s352 + $0x48] sm:$0xff]
        %v979 = vld [vmem:[%s352 + $0x50] sm:$0xff]
        %v980 = vld [vmem:[%s352 + $0x58] sm:$0xff]
        %v981 = vld [vmem:[%s352 + $0x60] sm:$0xff]
        %v982 = vld [vmem:[%s352 + $0x68] sm:$0xff]
        %v983 = vld [vmem:[%s352 + $0x70] sm:$0xff]
        %v984 = vld [vmem:[%s352 + $0x78] sm:$0xff]
        %v985 = vld [vmem:[%s352 + $0x80] sm:$0xff]
        %v986 = vld [vmem:[%s352 + $0x88] sm:$0xff]
        %v987 = vld [vmem:[%s352 + $0x90] sm:$0xff]
        %v988 = vld [vmem:[%s352 + $0x98] sm:$0xff]
        %v989 = vld [vmem:[%s352 + $0xa0] sm:$0xff]
        %v990 = vld [vmem:[%s352 + $0xa8] sm:$0xff]
        %v991 = vld [vmem:[%s352 + $0xb0] sm:$0xff]
        %v992 = vld [vmem:[%s352 + $0xb8] sm:$0xff]
        %v993 = vld [vmem:[%s352 + $0xc0] sm:$0xff]
        %v994 = vld [vmem:[%s352 + $0xc8] sm:$0xff]
        %v995 = vld [vmem:[%s352 + $0xd0] sm:$0xff]
        %v996 = vld [vmem:[%s352 + $0xd8] sm:$0xff]
        %v997 = vld [vmem:[%s352 + $0xe0] sm:$0xff]
        %v998 = vld [vmem:[%s352 + $0xe8] sm:$0xff]
        %v999 = vld [vmem:[%s352 + $0xf0] sm:$0xff]
        %v1000 = vld [vmem:[%s352 + $0xf8] sm:$0xff]
        %v1001 = vld [vmem:[%s352 + $0x100] sm:$0xff]
        %v1002 = vld [vmem:[%s352 + $0x108] sm:$0xff]
        %v1003 = vld [vmem:[%s352 + $0x110] sm:$0xff]
        %v1004 = vld [vmem:[%s352 + $0x118] sm:$0xff]
        %v1005 = vld [vmem:[%s352 + $0x120] sm:$0xff]
        %v1006 = vld [vmem:[%s352 + $0x128] sm:$0xff]
        %v1007 = vld [vmem:[%s352 + $0x130] sm:$0xff]
        %v1008 = vld [vmem:[%s352 + $0x138] sm:$0xff]
        %v1009 = vld [vmem:[%s352 + $0x140] sm:$0xff]
        %v1010 = vld [vmem:[%s352 + $0x148] sm:$0xff]
        %v1011 = vld [vmem:[%s352 + $0x150] sm:$0xff]
        %v1012 = vld [vmem:[%s352 + $0x158] sm:$0xff]
        %v1013 = vld [vmem:[%s352 + $0x160] sm:$0xff]
        %v1014 = vld [vmem:[%s352 + $0x168] sm:$0xff]
        %v1015 = vld [vmem:[%s352 + $0x170] sm:$0xff]
        %v1016 = vld [vmem:[%s352 + $0x178] sm:$0xff]
        %v1017 = vld [vmem:[%s352 + $0x180] sm:$0xff]
        %v1018 = vld [vmem:[%s352 + $0x188] sm:$0xff]
        %v1019 = vld [vmem:[%s352 + $0x190] sm:$0xff]
        %v1020 = vld [vmem:[%s352 + $0x198] sm:$0xff]
        %v1021 = vld [vmem:[%s352 + $0x1a0] sm:$0xff]
        %v1022 = vld [vmem:[%s352 + $0x1a8] sm:$0xff]
        %v1023 = vld [vmem:[%s352 + $0x1b0] sm:$0xff]
        %v1024 = vld [vmem:[%s352 + $0x1b8] sm:$0xff]
        %v1025 = vld [vmem:[%s352 + $0x1c0] sm:$0xff]
        %v1026 = vld [vmem:[%s352 + $0x1c8] sm:$0xff]
        %v1027 = vld [vmem:[%s352 + $0x1d0] sm:$0xff]
        %v1028 = vld [vmem:[%s352 + $0x1d8] sm:$0xff]
        %v1029 = vld [vmem:[%s352 + $0x1e0] sm:$0xff]
        %v1030 = vld [vmem:[%s352 + $0x1e8] sm:$0xff]
        %v1031 = vld [vmem:[%s352 + $0x1f0] sm:$0xff]
        %v1032 = vld [vmem:[%s352 + $0x1f8] sm:$0xff]
        %v1033 = vld [vmem:[%s352 + $0x200] sm:$0xff]
        %v1034 = vld [vmem:[%s352 + $0x208] sm:$0xff]
        %v1035 = vld [vmem:[%s352 + $0x210] sm:$0xff]
        %v1036 = vld [vmem:[%s352 + $0x218] sm:$0xff]
        %v1037 = vld [vmem:[%s352 + $0x220] sm:$0xff]
        %v1038 = vld [vmem:[%s352 + $0x228] sm:$0xff]
        %v1039 = vld [vmem:[%s352 + $0x230] sm:$0xff]
        %v1040 = vld [vmem:[%s352 + $0x238] sm:$0xff]
        %v1041 = vld [vmem:[%s352 + $0x240] sm:$0xff]
        %v1042 = vld [vmem:[%s352 + $0x248] sm:$0xff]
        %v1043 = vld [vmem:[%s352 + $0x250] sm:$0xff]
        %v1044 = vld [vmem:[%s352 + $0x258] sm:$0xff]
        %v1045 = vld [vmem:[%s352 + $0x260] sm:$0xff]
        %v1046 = vld [vmem:[%s352 + $0x268] sm:$0xff]
        %v1047 = vld [vmem:[%s352 + $0x270] sm:$0xff]
        %v1048 = vld [vmem:[%s352 + $0x278] sm:$0xff]
        %v1049 = vld [vmem:[%s352 + $0x280] sm:$0xff]
        %v1050 = vld [vmem:[%s352 + $0x288] sm:$0xff]
        %v1051 = vld [vmem:[%s352 + $0x290] sm:$0xff]
        %v1052 = vld [vmem:[%s352 + $0x298] sm:$0xff]
        %v1053 = vld [vmem:[%s352 + $0x2a0] sm:$0xff]
        %v1054 = vld [vmem:[%s352 + $0x2a8] sm:$0xff]
        %v1055 = vld [vmem:[%s352 + $0x2b0] sm:$0xff]
        %v1056 = vld [vmem:[%s352 + $0x2b8] sm:$0xff]
        %v1057 = vld [vmem:[%s352 + $0x2c0] sm:$0xff]
        %v1058 = vld [vmem:[%s352 + $0x2c8] sm:$0xff]
        %v1059 = vld [vmem:[%s352 + $0x2d0] sm:$0xff]
        %v1060 = vld [vmem:[%s352 + $0x2d8] sm:$0xff]
        %v1061 = vld [vmem:[%s352 + $0x2e0] sm:$0xff]
        %v1062 = vld [vmem:[%s352 + $0x2e8] sm:$0xff]
        %v1063 = vld [vmem:[%s352 + $0x2f0] sm:$0xff]
        %v1064 = vld [vmem:[%s352 + $0x2f8] sm:$0xff]
        %v1065 = vld [vmem:[%s352 + $0x300] sm:$0xff]
        %v1066 = vld [vmem:[%s352 + $0x308] sm:$0xff]
        %v1067 = vld [vmem:[%s352 + $0x310] sm:$0xff]
        %v1068 = vld [vmem:[%s352 + $0x318] sm:$0xff]
        %v1069 = vld [vmem:[%s352 + $0x320] sm:$0xff]
        %v1070 = vld [vmem:[%s352 + $0x328] sm:$0xff]
        %v1071 = vld [vmem:[%s352 + $0x330] sm:$0xff]
        %v1072 = vld [vmem:[%s352 + $0x338] sm:$0xff]
        %v1073 = vld [vmem:[%s352 + $0x340] sm:$0xff]
        %v1074 = vld [vmem:[%s352 + $0x348] sm:$0xff]
        %v1075 = vld [vmem:[%s352 + $0x350] sm:$0xff]
        %v1076 = vld [vmem:[%s352 + $0x358] sm:$0xff]
        %v1077 = vld [vmem:[%s352 + $0x360] sm:$0xff]
        %v1078 = vld [vmem:[%s352 + $0x368] sm:$0xff]
        %v1079 = vld [vmem:[%s352 + $0x370] sm:$0xff]
        %v1080 = vld [vmem:[%s352 + $0x378] sm:$0xff]
        %v1081 = vld [vmem:[%s352 + $0x380] sm:$0xff]
        %v1082 = vld [vmem:[%s352 + $0x388] sm:$0xff]
        %v1083 = vld [vmem:[%s352 + $0x390] sm:$0xff]
        %v1084 = vld [vmem:[%s352 + $0x398] sm:$0xff]
        %v1085 = vld [vmem:[%s352 + $0x3a0] sm:$0xff]
        %v1086 = vld [vmem:[%s352 + $0x3a8] sm:$0xff]
        %v1087 = vld [vmem:[%s352 + $0x3b0] sm:$0xff]
        %v1088 = vld [vmem:[%s352 + $0x3b8] sm:$0xff]
        %v1089 = vld [vmem:[%s352 + $0x3c0] sm:$0xff]
        %v1090 = vld [vmem:[%s352 + $0x3c8] sm:$0xff]
        %v1091 = vld [vmem:[%s352 + $0x3d0] sm:$0xff]
        %v1092 = vld [vmem:[%s352 + $0x3d8] sm:$0xff]
        %v1093 = vld [vmem:[%s352 + $0x3e0] sm:$0xff]
        %v1094 = vld [vmem:[%s352 + $0x3e8] sm:$0xff]
        %v1095 = vld [vmem:[%s352 + $0x3f0] sm:$0xff]
        %v1096 = vld [vmem:[%s352 + $0x3f8] sm:$0xff]
        %v1097 = vrot.slane %v415, 2
        %1099 = vmatpush.xpose.msra.mxu0 %v984
        %1100 = vmatpush.xpose.msra.mxu0 %v983
        %1101 = vmatpush.xpose.msra.mxu0 %v982
        %1102 = vmatpush.xpose.msra.mxu0 %v981
        %1103 = vmatpush.xpose.msra.mxu0 %v980
        %1104 = vmatpush.xpose.msra.mxu0 %v979
        %1105 = vmatpush.xpose.msra.mxu0 %v978
        %1106 = vmatpush.xpose.msra.mxu0 %v977
        %1107 = vmatpush.xpose.msra.mxu0 %v976
        %1108 = vmatpush.xpose.msra.mxu0 %v975
        %1109 = vmatpush.xpose.msra.mxu0 %v974
        %1110 = vmatpush.xpose.msra.mxu0 %v973
        %1111 = vmatpush.xpose.msra.mxu0 %v972
        %1112 = vmatpush.xpose.msra.mxu0 %v971
        %1113 = vmatpush.xpose.msra.mxu0 %v970
        %1114 = vmatpush.xpose.msra.mxu0 %v969
        %1115 = vmatmul.f32.gmra.mxu0 %v961
        %v1116 = vpop.f32.mrf.mxu0
        %v1117 = vadd.f32 %v1097, %v1116
        %1118 = vdwg.mxu0
        %v1119 = vrot.slane %v416, 2
        %1121 = vmatpush.xpose.msra.mxu0 %v1000
        %1122 = vmatpush.xpose.msra.mxu0 %v999
        %1123 = vmatpush.xpose.msra.mxu0 %v998
        %1124 = vmatpush.xpose.msra.mxu0 %v997
        %1125 = vmatpush.xpose.msra.mxu0 %v996
        %1126 = vmatpush.xpose.msra.mxu0 %v995
        %1127 = vmatpush.xpose.msra.mxu0 %v994
        %1128 = vmatpush.xpose.msra.mxu0 %v993
        %1129 = vmatpush.xpose.msra.mxu0 %v992
        %1130 = vmatpush.xpose.msra.mxu0 %v991
        %1131 = vmatpush.xpose.msra.mxu0 %v990
        %1132 = vmatpush.xpose.msra.mxu0 %v989
        %1133 = vmatpush.xpose.msra.mxu0 %v988
        %1134 = vmatpush.xpose.msra.mxu0 %v987
        %1135 = vmatpush.xpose.msra.mxu0 %v986
        %1136 = vmatpush.xpose.msra.mxu0 %v985
        %1137 = vmatmul.f32.gmra.mxu0 %v962
        %v1138 = vpop.f32.mrf.mxu0
        %v1139 = vadd.f32 %v1119, %v1138
        %1140 = vdwg.mxu0
        %v1141 = vrot.slane %v417, 2
        %1143 = vmatpush.xpose.msra.mxu0 %v1016
        %1144 = vmatpush.xpose.msra.mxu0 %v1015
        %1145 = vmatpush.xpose.msra.mxu0 %v1014
        %1146 = vmatpush.xpose.msra.mxu0 %v1013
        %1147 = vmatpush.xpose.msra.mxu0 %v1012
        %1148 = vmatpush.xpose.msra.mxu0 %v1011
        %1149 = vmatpush.xpose.msra.mxu0 %v1010
        %1150 = vmatpush.xpose.msra.mxu0 %v1009
        %1151 = vmatpush.xpose.msra.mxu0 %v1008
        %1152 = vmatpush.xpose.msra.mxu0 %v1007
        %1153 = vmatpush.xpose.msra.mxu0 %v1006
        %1154 = vmatpush.xpose.msra.mxu0 %v1005
        %1155 = vmatpush.xpose.msra.mxu0 %v1004
        %1156 = vmatpush.xpose.msra.mxu0 %v1003
        %1157 = vmatpush.xpose.msra.mxu0 %v1002
        %1158 = vmatpush.xpose.msra.mxu0 %v1001
        %1159 = vmatmul.f32.gmra.mxu0 %v963
        %v1160 = vpop.f32.mrf.mxu0
        %v1161 = vadd.f32 %v1141, %v1160
        %1162 = vdwg.mxu0
        %v1163 = vrot.slane %v418, 2
        %1165 = vmatpush.xpose.msra.mxu0 %v1032
        %1166 = vmatpush.xpose.msra.mxu0 %v1031
        %1167 = vmatpush.xpose.msra.mxu0 %v1030
        %1168 = vmatpush.xpose.msra.mxu0 %v1029
        %1169 = vmatpush.xpose.msra.mxu0 %v1028
        %1170 = vmatpush.xpose.msra.mxu0 %v1027
        %1171 = vmatpush.xpose.msra.mxu0 %v1026
        %1172 = vmatpush.xpose.msra.mxu0 %v1025
        %1173 = vmatpush.xpose.msra.mxu0 %v1024
        %1174 = vmatpush.xpose.msra.mxu0 %v1023
        %1175 = vmatpush.xpose.msra.mxu0 %v1022
        %1176 = vmatpush.xpose.msra.mxu0 %v1021
        %1177 = vmatpush.xpose.msra.mxu0 %v1020
        %1178 = vmatpush.xpose.msra.mxu0 %v1019
        %1179 = vmatpush.xpose.msra.mxu0 %v1018
        %1180 = vmatpush.xpose.msra.mxu0 %v1017
        %1181 = vmatmul.f32.gmra.mxu0 %v964
        %v1182 = vpop.f32.mrf.mxu0
        %v1183 = vadd.f32 %v1163, %v1182
        %1184 = vdwg.mxu0
        %v1185 = vrot.slane %v419, 2
        %1187 = vmatpush.xpose.msra.mxu0 %v1048
        %1188 = vmatpush.xpose.msra.mxu0 %v1047
        %1189 = vmatpush.xpose.msra.mxu0 %v1046
        %1190 = vmatpush.xpose.msra.mxu0 %v1045
        %1191 = vmatpush.xpose.msra.mxu0 %v1044
        %1192 = vmatpush.xpose.msra.mxu0 %v1043
        %1193 = vmatpush.xpose.msra.mxu0 %v1042
        %1194 = vmatpush.xpose.msra.mxu0 %v1041
        %1195 = vmatpush.xpose.msra.mxu0 %v1040
        %1196 = vmatpush.xpose.msra.mxu0 %v1039
        %1197 = vmatpush.xpose.msra.mxu0 %v1038
        %1198 = vmatpush.xpose.msra.mxu0 %v1037
        %1199 = vmatpush.xpose.msra.mxu0 %v1036
        %1200 = vmatpush.xpose.msra.mxu0 %v1035
        %1201 = vmatpush.xpose.msra.mxu0 %v1034
        %1202 = vmatpush.xpose.msra.mxu0 %v1033
        %1203 = vmatmul.f32.gmra.mxu0 %v965
        %v1204 = vpop.f32.mrf.mxu0
        %v1205 = vadd.f32 %v1185, %v1204
        %1206 = vdwg.mxu0
        %v1207 = vrot.slane %v420, 2
        %1209 = vmatpush.xpose.msra.mxu0 %v1064
        %1210 = vmatpush.xpose.msra.mxu0 %v1063
        %1211 = vmatpush.xpose.msra.mxu0 %v1062
        %1212 = vmatpush.xpose.msra.mxu0 %v1061
        %1213 = vmatpush.xpose.msra.mxu0 %v1060
        %1214 = vmatpush.xpose.msra.mxu0 %v1059
        %1215 = vmatpush.xpose.msra.mxu0 %v1058
        %1216 = vmatpush.xpose.msra.mxu0 %v1057
        %1217 = vmatpush.xpose.msra.mxu0 %v1056
        %1218 = vmatpush.xpose.msra.mxu0 %v1055
        %1219 = vmatpush.xpose.msra.mxu0 %v1054
        %1220 = vmatpush.xpose.msra.mxu0 %v1053
        %1221 = vmatpush.xpose.msra.mxu0 %v1052
        %1222 = vmatpush.xpose.msra.mxu0 %v1051
        %1223 = vmatpush.xpose.msra.mxu0 %v1050
        %1224 = vmatpush.xpose.msra.mxu0 %v1049
        %1225 = vmatmul.f32.gmra.mxu0 %v966
        %v1226 = vpop.f32.mrf.mxu0
        %v1227 = vadd.f32 %v1207, %v1226
        %1228 = vdwg.mxu0
        %v1229 = vrot.slane %v421, 2
        %1231 = vmatpush.xpose.msra.mxu0 %v1080
        %1232 = vmatpush.xpose.msra.mxu0 %v1079
        %1233 = vmatpush.xpose.msra.mxu0 %v1078
        %1234 = vmatpush.xpose.msra.mxu0 %v1077
        %1235 = vmatpush.xpose.msra.mxu0 %v1076
        %1236 = vmatpush.xpose.msra.mxu0 %v1075
        %1237 = vmatpush.xpose.msra.mxu0 %v1074
        %1238 = vmatpush.xpose.msra.mxu0 %v1073
        %1239 = vmatpush.xpose.msra.mxu0 %v1072
        %1240 = vmatpush.xpose.msra.mxu0 %v1071
        %1241 = vmatpush.xpose.msra.mxu0 %v1070
        %1242 = vmatpush.xpose.msra.mxu0 %v1069
        %1243 = vmatpush.xpose.msra.mxu0 %v1068
        %1244 = vmatpush.xpose.msra.mxu0 %v1067
        %1245 = vmatpush.xpose.msra.mxu0 %v1066
        %1246 = vmatpush.xpose.msra.mxu0 %v1065
        %1247 = vmatmul.f32.gmra.mxu0 %v967
        %v1248 = vpop.f32.mrf.mxu0
        %v1249 = vadd.f32 %v1229, %v1248
        %1250 = vdwg.mxu0
        %v1251 = vrot.slane %v422, 2
        %1253 = vmatpush.xpose.msra.mxu0 %v1096
        %1254 = vmatpush.xpose.msra.mxu0 %v1095
        %1255 = vmatpush.xpose.msra.mxu0 %v1094
        %1256 = vmatpush.xpose.msra.mxu0 %v1093
        %1257 = vmatpush.xpose.msra.mxu0 %v1092
        %1258 = vmatpush.xpose.msra.mxu0 %v1091
        %1259 = vmatpush.xpose.msra.mxu0 %v1090
        %1260 = vmatpush.xpose.msra.mxu0 %v1089
        %1261 = vmatpush.xpose.msra.mxu0 %v1088
        %1262 = vmatpush.xpose.msra.mxu0 %v1087
        %1263 = vmatpush.xpose.msra.mxu0 %v1086
        %1264 = vmatpush.xpose.msra.mxu0 %v1085
        %1265 = vmatpush.xpose.msra.mxu0 %v1084
        %1266 = vmatpush.xpose.msra.mxu0 %v1083
        %1267 = vmatpush.xpose.msra.mxu0 %v1082
        %1268 = vmatpush.xpose.msra.mxu0 %v1081
        %1269 = vmatmul.f32.gmra.mxu0 %v968
        %v1270 = vpop.f32.mrf.mxu0
        %v1271 = vadd.f32 %v1251, %v1270
        %1272 = vdwg.mxu0
        %v1273 = vmax.f32 %v1117, 0.0
        %v1274 = vmax.f32 %v1139, 0.0
        %v1275 = vmax.f32 %v1161, 0.0
        %v1276 = vmax.f32 %v1183, 0.0
        %v1277 = vmax.f32 %v1205, 0.0
        %v1278 = vmax.f32 %v1227, 0.0
        %v1279 = vmax.f32 %v1249, 0.0
        %v1280 = vmax.f32 %v1271, 0.0
        %v1281 = vld [vmem:[%s362] sm:$0xff]
        %v1282 = vld [vmem:[%s362 + $0x8] sm:$0xff]
        %v1283 = vld [vmem:[%s362 + $0x10] sm:$0xff]
        %v1284 = vld [vmem:[%s362 + $0x18] sm:$0xff]
        %v1285 = vld [vmem:[%s362 + $0x20] sm:$0xff]
        %v1286 = vld [vmem:[%s362 + $0x28] sm:$0xff]
        %v1287 = vld [vmem:[%s362 + $0x30] sm:$0xff]
        %v1288 = vld [vmem:[%s362 + $0x38] sm:$0xff]
        %v1289 = vld [vmem:[%s362 + $0x40] sm:$0xff]
        %v1290 = vld [vmem:[%s362 + $0x48] sm:$0xff]
        %v1291 = vld [vmem:[%s362 + $0x50] sm:$0xff]
        %v1292 = vld [vmem:[%s362 + $0x58] sm:$0xff]
        %v1293 = vld [vmem:[%s362 + $0x60] sm:$0xff]
        %v1294 = vld [vmem:[%s362 + $0x68] sm:$0xff]
        %v1295 = vld [vmem:[%s362 + $0x70] sm:$0xff]
        %v1296 = vld [vmem:[%s362 + $0x78] sm:$0xff]
        %v1297 = vld [vmem:[%s362 + $0x80] sm:$0xff]
        %v1298 = vld [vmem:[%s362 + $0x88] sm:$0xff]
        %v1299 = vld [vmem:[%s362 + $0x90] sm:$0xff]
        %v1300 = vld [vmem:[%s362 + $0x98] sm:$0xff]
        %v1301 = vld [vmem:[%s362 + $0xa0] sm:$0xff]
        %v1302 = vld [vmem:[%s362 + $0xa8] sm:$0xff]
        %v1303 = vld [vmem:[%s362 + $0xb0] sm:$0xff]
        %v1304 = vld [vmem:[%s362 + $0xb8] sm:$0xff]
        %1305 = vmatpush.xpose.msra.mxu0 0.0
        %1306 = vmatpush.xpose.msra.mxu0 0.0
        %1307 = vmatpush.xpose.msra.mxu0 0.0
        %1308 = vmatpush.xpose.msra.mxu0 0.0
        %1309 = vmatpush.xpose.msra.mxu0 0.0
        %1310 = vmatpush.xpose.msra.mxu0 0.0
        %1311 = vmatpush.xpose.msra.mxu0 0.0
        %1312 = vmatpush.xpose.msra.mxu0 0.0
        %1313 = vmatpush.xpose.msra.mxu0 0.0
        %1314 = vmatpush.xpose.msra.mxu0 0.0
        %1315 = vmatpush.xpose.msra.mxu0 0.0
        %1316 = vmatpush.xpose.msra.mxu0 0.0
        %1317 = vmatpush.xpose.msra.mxu0 0.0
        %1318 = vmatpush.xpose.msra.mxu0 %v1283
        %1319 = vmatpush.xpose.msra.mxu0 %v1282
        %1320 = vmatpush.xpose.msra.mxu0 %v1281
        %1321 = vmatmul.f32.gmra.mxu0 %v1273
        %v1322 = vpop.f32.mrf.mxu0
        %v1323 = vadd.f32 0.0, %v1322
        %1324 = vdwg.mxu0
        %1325 = vmatpush.xpose.msra.mxu0 0.0
        %1326 = vmatpush.xpose.msra.mxu0 0.0
        %1327 = vmatpush.xpose.msra.mxu0 0.0
        %1328 = vmatpush.xpose.msra.mxu0 0.0
        %1329 = vmatpush.xpose.msra.mxu0 0.0
        %1330 = vmatpush.xpose.msra.mxu0 0.0
        %1331 = vmatpush.xpose.msra.mxu0 0.0
        %1332 = vmatpush.xpose.msra.mxu0 0.0
        %1333 = vmatpush.xpose.msra.mxu0 0.0
        %1334 = vmatpush.xpose.msra.mxu0 0.0
        %1335 = vmatpush.xpose.msra.mxu0 0.0
        %1336 = vmatpush.xpose.msra.mxu0 0.0
        %1337 = vmatpush.xpose.msra.mxu0 0.0
        %1338 = vmatpush.xpose.msra.mxu0 %v1286
        %1339 = vmatpush.xpose.msra.mxu0 %v1285
        %1340 = vmatpush.xpose.msra.mxu0 %v1284
        %1341 = vmatmul.f32.gmra.mxu0 %v1274
        %v1342 = vpop.f32.mrf.mxu0
        %v1343 = vadd.f32 0.0, %v1342
        %1344 = vdwg.mxu0
        %1345 = vmatpush.xpose.msra.mxu0 0.0
        %1346 = vmatpush.xpose.msra.mxu0 0.0
        %1347 = vmatpush.xpose.msra.mxu0 0.0
        %1348 = vmatpush.xpose.msra.mxu0 0.0
        %1349 = vmatpush.xpose.msra.mxu0 0.0
        %1350 = vmatpush.xpose.msra.mxu0 0.0
        %1351 = vmatpush.xpose.msra.mxu0 0.0
        %1352 = vmatpush.xpose.msra.mxu0 0.0
        %1353 = vmatpush.xpose.msra.mxu0 0.0
        %1354 = vmatpush.xpose.msra.mxu0 0.0
        %1355 = vmatpush.xpose.msra.mxu0 0.0
        %1356 = vmatpush.xpose.msra.mxu0 0.0
        %1357 = vmatpush.xpose.msra.mxu0 0.0
        %1358 = vmatpush.xpose.msra.mxu0 %v1289
        %1359 = vmatpush.xpose.msra.mxu0 %v1288
        %1360 = vmatpush.xpose.msra.mxu0 %v1287
        %1361 = vmatmul.f32.gmra.mxu0 %v1275
        %v1362 = vpop.f32.mrf.mxu0
        %v1363 = vadd.f32 0.0, %v1362
        %1364 = vdwg.mxu0
        %1365 = vmatpush.xpose.msra.mxu0 0.0
        %1366 = vmatpush.xpose.msra.mxu0 0.0
        %1367 = vmatpush.xpose.msra.mxu0 0.0
        %1368 = vmatpush.xpose.msra.mxu0 0.0
        %1369 = vmatpush.xpose.msra.mxu0 0.0
        %1370 = vmatpush.xpose.msra.mxu0 0.0
        %1371 = vmatpush.xpose.msra.mxu0 0.0
        %1372 = vmatpush.xpose.msra.mxu0 0.0
        %1373 = vmatpush.xpose.msra.mxu0 0.0
        %1374 = vmatpush.xpose.msra.mxu0 0.0
        %1375 = vmatpush.xpose.msra.mxu0 0.0
        %1376 = vmatpush.xpose.msra.mxu0 0.0
        %1377 = vmatpush.xpose.msra.mxu0 0.0
        %1378 = vmatpush.xpose.msra.mxu0 %v1292
        %1379 = vmatpush.xpose.msra.mxu0 %v1291
        %1380 = vmatpush.xpose.msra.mxu0 %v1290
        %1381 = vmatmul.f32.gmra.mxu0 %v1276
        %v1382 = vpop.f32.mrf.mxu0
        %v1383 = vadd.f32 0.0, %v1382
        %1384 = vdwg.mxu0
        %1385 = vmatpush.xpose.msra.mxu0 0.0
        %1386 = vmatpush.xpose.msra.mxu0 0.0
        %1387 = vmatpush.xpose.msra.mxu0 0.0
        %1388 = vmatpush.xpose.msra.mxu0 0.0
        %1389 = vmatpush.xpose.msra.mxu0 0.0
        %1390 = vmatpush.xpose.msra.mxu0 0.0
        %1391 = vmatpush.xpose.msra.mxu0 0.0
        %1392 = vmatpush.xpose.msra.mxu0 0.0
        %1393 = vmatpush.xpose.msra.mxu0 0.0
        %1394 = vmatpush.xpose.msra.mxu0 0.0
        %1395 = vmatpush.xpose.msra.mxu0 0.0
        %1396 = vmatpush.xpose.msra.mxu0 0.0
        %1397 = vmatpush.xpose.msra.mxu0 0.0
        %1398 = vmatpush.xpose.msra.mxu0 %v1295
        %1399 = vmatpush.xpose.msra.mxu0 %v1294
        %1400 = vmatpush.xpose.msra.mxu0 %v1293
        %1401 = vmatmul.f32.gmra.mxu0 %v1277
        %v1402 = vpop.f32.mrf.mxu0
        %v1403 = vadd.f32 0.0, %v1402
        %1404 = vdwg.mxu0
        %1405 = vmatpush.xpose.msra.mxu0 0.0
        %1406 = vmatpush.xpose.msra.mxu0 0.0
        %1407 = vmatpush.xpose.msra.mxu0 0.0
        %1408 = vmatpush.xpose.msra.mxu0 0.0
        %1409 = vmatpush.xpose.msra.mxu0 0.0
        %1410 = vmatpush.xpose.msra.mxu0 0.0
        %1411 = vmatpush.xpose.msra.mxu0 0.0
        %1412 = vmatpush.xpose.msra.mxu0 0.0
        %1413 = vmatpush.xpose.msra.mxu0 0.0
        %1414 = vmatpush.xpose.msra.mxu0 0.0
        %1415 = vmatpush.xpose.msra.mxu0 0.0
        %1416 = vmatpush.xpose.msra.mxu0 0.0
        %1417 = vmatpush.xpose.msra.mxu0 0.0
        %1418 = vmatpush.xpose.msra.mxu0 %v1298
        %1419 = vmatpush.xpose.msra.mxu0 %v1297
        %1420 = vmatpush.xpose.msra.mxu0 %v1296
        %1421 = vmatmul.f32.gmra.mxu0 %v1278
        %v1422 = vpop.f32.mrf.mxu0
        %v1423 = vadd.f32 0.0, %v1422
        %1424 = vdwg.mxu0
        %1425 = vmatpush.xpose.msra.mxu0 0.0
        %1426 = vmatpush.xpose.msra.mxu0 0.0
        %1427 = vmatpush.xpose.msra.mxu0 0.0
        %1428 = vmatpush.xpose.msra.mxu0 0.0
        %1429 = vmatpush.xpose.msra.mxu0 0.0
        %1430 = vmatpush.xpose.msra.mxu0 0.0
        %1431 = vmatpush.xpose.msra.mxu0 0.0
        %1432 = vmatpush.xpose.msra.mxu0 0.0
        %1433 = vmatpush.xpose.msra.mxu0 0.0
        %1434 = vmatpush.xpose.msra.mxu0 0.0
        %1435 = vmatpush.xpose.msra.mxu0 0.0
        %1436 = vmatpush.xpose.msra.mxu0 0.0
        %1437 = vmatpush.xpose.msra.mxu0 0.0
        %1438 = vmatpush.xpose.msra.mxu0 %v1301
        %1439 = vmatpush.xpose.msra.mxu0 %v1300
        %1440 = vmatpush.xpose.msra.mxu0 %v1299
        %1441 = vmatmul.f32.gmra.mxu0 %v1279
        %v1442 = vpop.f32.mrf.mxu0
        %v1443 = vadd.f32 0.0, %v1442
        %1444 = vdwg.mxu0
        %1445 = vmatpush.xpose.msra.mxu0 0.0
        %1446 = vmatpush.xpose.msra.mxu0 0.0
        %1447 = vmatpush.xpose.msra.mxu0 0.0
        %1448 = vmatpush.xpose.msra.mxu0 0.0
        %1449 = vmatpush.xpose.msra.mxu0 0.0
        %1450 = vmatpush.xpose.msra.mxu0 0.0
        %1451 = vmatpush.xpose.msra.mxu0 0.0
        %1452 = vmatpush.xpose.msra.mxu0 0.0
        %1453 = vmatpush.xpose.msra.mxu0 0.0
        %1454 = vmatpush.xpose.msra.mxu0 0.0
        %1455 = vmatpush.xpose.msra.mxu0 0.0
        %1456 = vmatpush.xpose.msra.mxu0 0.0
        %1457 = vmatpush.xpose.msra.mxu0 0.0
        %1458 = vmatpush.xpose.msra.mxu0 %v1304
        %1459 = vmatpush.xpose.msra.mxu0 %v1303
        %1460 = vmatpush.xpose.msra.mxu0 %v1302
        %1461 = vmatmul.f32.gmra.mxu0 %v1280
        %v1462 = vpop.f32.mrf.mxu0
        %v1463 = vadd.f32 0.0, %v1462
        %1464 = vdwg.mxu0
        %v1465 = vlaneseq
        %v1466 = vand.u32 %v1465, 127
        %vm1467 = vcmp.lt.s32.totalorder %v1466, 0
        %v1468 = vsub.s32 0, %v1466
        %v1469 = vsel %vm1467, %v1468, %v1466
        %v1470 = vand.u32 %v1469, 65535
        %v1471 = vshrl.u32 %v1469, 16
        %v1473 = vmul.u32 %v1470, 43691
        %v1474 = vmul.u32 %v1470, 43690
        %v1475 = vmul.u32 %v1471, 43691
        %v1476 = vmul.u32 %v1471, 43690
        %v1477 = vshll.u32 %v1474, 16
        %v1478 = vshrl.u32 %v1474, 16
        %v1479 = vshll.u32 %v1475, 16
        %v1480 = vshrl.u32 %v1475, 16
        %vm1481 = vc.u32 %v1473, %v1477
        %v1482 = vsel %vm1481, 1, 0
        %v1483 = vadd.s32 %v1473, %v1477
        %v1484 = vadd.s32 %v1476, %v1482
        %vm1485 = vc.u32 %v1483, %v1479
        %v1486 = vsel %vm1485, 1, 0
        %v1487 = vadd.s32 %v1483, %v1479
        %v1488 = vadd.s32 %v1484, %v1486
        %v1489 = vadd.s32 %v1488, %v1478
        %v1490 = vadd.s32 %v1489, %v1480
        %v1491 = vshrl.u32 %v1490, 1
        %v1492 = vmul.u32 %v1491, 3
        %v1493 = vsub.s32 %v1469, %v1492
        %v1494 = vsub.s32 0, %v1493
        %v1495 = vsel %vm1467, %v1494, %v1493
        %vm1496 = vcmp.ne.s32.totalorder %v1495, 0
        %vm1497 = vcmp.lt.s32.totalorder %v1495, 0
        %vm1498 = vmand %vm1497, %vm1496
        %v1499 = vadd.s32 %v1495, 3
        %v1500 = vsel %vm1498, %v1499, %v1495
        %vm1501 = vcmp.eq.s32.totalorder %v1500, 2
        %v1502 = vsel %vm1501, 1, 0
        %v1503 = vcvt.s32.f32 %v1502
        %v1504 = vperm.slane %v1323, 0
        %v1505 = vlaneseq
        %v1506 = vshrl.u32 %v1505, 7
        %1508 = vset.pattern.permute.xlu0 %v1506
        %1509 = vperm.xlu0 %1508, %v1504
        %v1510 = vpop.permute.xlu0 %1509
        %v1511 = vlaneseq
        %v1512 = vshrl.u32 %v1511, 7
        %v1513 = vadd.s32 %v1512, 8
        %1514 = vset.pattern.permute.xlu0 %v1513
        %1515 = vperm.xlu0 %1514, %v1504
        %v1516 = vpop.permute.xlu0 %1515
        %v1517 = vlaneseq
        %v1518 = vshrl.u32 %v1517, 7
        %v1519 = vadd.s32 %v1518, 16
        %1520 = vset.pattern.permute.xlu0 %v1519
        %1521 = vperm.xlu0 %1520, %v1504
        %v1522 = vpop.permute.xlu0 %1521
        %v1523 = vperm.slane %v1343, 0
        %v1524 = vlaneseq
        %v1525 = vshrl.u32 %v1524, 7
        %1527 = vset.pattern.permute.xlu0 %v1525
        %1528 = vperm.xlu0 %1527, %v1523
        %v1529 = vpop.permute.xlu0 %1528
        %v1530 = vlaneseq
        %v1531 = vshrl.u32 %v1530, 7
        %v1532 = vadd.s32 %v1531, 8
        %1533 = vset.pattern.permute.xlu0 %v1532
        %1534 = vperm.xlu0 %1533, %v1523
        %v1535 = vpop.permute.xlu0 %1534
        %v1536 = vlaneseq
        %v1537 = vshrl.u32 %v1536, 7
        %v1538 = vadd.s32 %v1537, 16
        %1539 = vset.pattern.permute.xlu0 %v1538
        %1540 = vperm.xlu0 %1539, %v1523
        %v1541 = vpop.permute.xlu0 %1540
        %v1542 = vperm.slane %v1363, 0
        %v1543 = vlaneseq
        %v1544 = vshrl.u32 %v1543, 7
        %1546 = vset.pattern.permute.xlu0 %v1544
        %1547 = vperm.xlu0 %1546, %v1542
        %v1548 = vpop.permute.xlu0 %1547
        %v1549 = vlaneseq
        %v1550 = vshrl.u32 %v1549, 7
        %v1551 = vadd.s32 %v1550, 8
        %1552 = vset.pattern.permute.xlu0 %v1551
        %1553 = vperm.xlu0 %1552, %v1542
        %v1554 = vpop.permute.xlu0 %1553
        %v1555 = vlaneseq
        %v1556 = vshrl.u32 %v1555, 7
        %v1557 = vadd.s32 %v1556, 16
        %1558 = vset.pattern.permute.xlu0 %v1557
        %1559 = vperm.xlu0 %1558, %v1542
        %v1560 = vpop.permute.xlu0 %1559
        %v1561 = vperm.slane %v1383, 0
        %v1562 = vlaneseq
        %v1563 = vshrl.u32 %v1562, 7
        %1565 = vset.pattern.permute.xlu0 %v1563
        %1566 = vperm.xlu0 %1565, %v1561
        %v1567 = vpop.permute.xlu0 %1566
        %v1568 = vlaneseq
        %v1569 = vshrl.u32 %v1568, 7
        %v1570 = vadd.s32 %v1569, 8
        %1571 = vset.pattern.permute.xlu0 %v1570
        %1572 = vperm.xlu0 %1571, %v1561
        %v1573 = vpop.permute.xlu0 %1572
        %v1574 = vlaneseq
        %v1575 = vshrl.u32 %v1574, 7
        %v1576 = vadd.s32 %v1575, 16
        %1577 = vset.pattern.permute.xlu0 %v1576
        %1578 = vperm.xlu0 %1577, %v1561
        %v1579 = vpop.permute.xlu0 %1578
        %v1580 = vperm.slane %v1403, 0
        %v1581 = vlaneseq
        %v1582 = vshrl.u32 %v1581, 7
        %1584 = vset.pattern.permute.xlu0 %v1582
        %1585 = vperm.xlu0 %1584, %v1580
        %v1586 = vpop.permute.xlu0 %1585
        %v1587 = vlaneseq
        %v1588 = vshrl.u32 %v1587, 7
        %v1589 = vadd.s32 %v1588, 8
        %1590 = vset.pattern.permute.xlu0 %v1589
        %1591 = vperm.xlu0 %1590, %v1580
        %v1592 = vpop.permute.xlu0 %1591
        %v1593 = vlaneseq
        %v1594 = vshrl.u32 %v1593, 7
        %v1595 = vadd.s32 %v1594, 16
        %1596 = vset.pattern.permute.xlu0 %v1595
        %1597 = vperm.xlu0 %1596, %v1580
        %v1598 = vpop.permute.xlu0 %1597
        %v1599 = vperm.slane %v1423, 0
        %v1600 = vlaneseq
        %v1601 = vshrl.u32 %v1600, 7
        %1603 = vset.pattern.permute.xlu0 %v1601
        %1604 = vperm.xlu0 %1603, %v1599
        %v1605 = vpop.permute.xlu0 %1604
        %v1606 = vlaneseq
        %v1607 = vshrl.u32 %v1606, 7
        %v1608 = vadd.s32 %v1607, 8
        %1609 = vset.pattern.permute.xlu0 %v1608
        %1610 = vperm.xlu0 %1609, %v1599
        %v1611 = vpop.permute.xlu0 %1610
        %v1612 = vlaneseq
        %v1613 = vshrl.u32 %v1612, 7
        %v1614 = vadd.s32 %v1613, 16
        %1615 = vset.pattern.permute.xlu0 %v1614
        %1616 = vperm.xlu0 %1615, %v1599
        %v1617 = vpop.permute.xlu0 %1616
        %v1618 = vperm.slane %v1443, 0
        %v1619 = vlaneseq
        %v1620 = vshrl.u32 %v1619, 7
        %1622 = vset.pattern.permute.xlu0 %v1620
        %1623 = vperm.xlu0 %1622, %v1618
        %v1624 = vpop.permute.xlu0 %1623
        %v1625 = vlaneseq
        %v1626 = vshrl.u32 %v1625, 7
        %v1627 = vadd.s32 %v1626, 8
        %1628 = vset.pattern.permute.xlu0 %v1627
        %1629 = vperm.xlu0 %1628, %v1618
        %v1630 = vpop.permute.xlu0 %1629
        %v1631 = vlaneseq
        %v1632 = vshrl.u32 %v1631, 7
        %v1633 = vadd.s32 %v1632, 16
        %1634 = vset.pattern.permute.xlu0 %v1633
        %1635 = vperm.xlu0 %1634, %v1618
        %v1636 = vpop.permute.xlu0 %1635
        %v1637 = vperm.slane %v1463, 0
        %v1638 = vlaneseq
        %v1639 = vshrl.u32 %v1638, 7
        %1641 = vset.pattern.permute.xlu0 %v1639
        %1642 = vperm.xlu0 %1641, %v1637
        %v1643 = vpop.permute.xlu0 %1642
        %v1644 = vlaneseq
        %v1645 = vshrl.u32 %v1644, 7
        %v1646 = vadd.s32 %v1645, 8
        %1647 = vset.pattern.permute.xlu0 %v1646
        %1648 = vperm.xlu0 %1647, %v1637
        %v1649 = vpop.permute.xlu0 %1648
        %v1650 = vlaneseq
        %v1651 = vshrl.u32 %v1650, 7
        %v1652 = vadd.s32 %v1651, 16
        %1653 = vset.pattern.permute.xlu0 %v1652
        %1654 = vperm.xlu0 %1653, %v1637
        %v1655 = vpop.permute.xlu0 %1654
        %vm1656 = vcmp.ge.f32.partialorder %v1504, %v1510
        %vm1657 = vcmp.ge.f32.partialorder %v1504, %v1516
        %vm1658 = vcmp.ge.f32.partialorder %v1504, %v1522
        %vm1659 = vcmp.ge.f32.partialorder %v1523, %v1529
        %vm1660 = vcmp.ge.f32.partialorder %v1523, %v1535
        %vm1661 = vcmp.ge.f32.partialorder %v1523, %v1541
        %vm1662 = vcmp.ge.f32.partialorder %v1542, %v1548
        %vm1663 = vcmp.ge.f32.partialorder %v1542, %v1554
        %vm1664 = vcmp.ge.f32.partialorder %v1542, %v1560
        %vm1665 = vcmp.ge.f32.partialorder %v1561, %v1567
        %vm1666 = vcmp.ge.f32.partialorder %v1561, %v1573
        %vm1667 = vcmp.ge.f32.partialorder %v1561, %v1579
        %vm1668 = vcmp.ge.f32.partialorder %v1580, %v1586
        %vm1669 = vcmp.ge.f32.partialorder %v1580, %v1592
        %vm1670 = vcmp.ge.f32.partialorder %v1580, %v1598
        %vm1671 = vcmp.ge.f32.partialorder %v1599, %v1605
        %vm1672 = vcmp.ge.f32.partialorder %v1599, %v1611
        %vm1673 = vcmp.ge.f32.partialorder %v1599, %v1617
        %vm1674 = vcmp.ge.f32.partialorder %v1618, %v1624
        %vm1675 = vcmp.ge.f32.partialorder %v1618, %v1630
        %vm1676 = vcmp.ge.f32.partialorder %v1618, %v1636
        %vm1677 = vcmp.ge.f32.partialorder %v1637, %v1643
        %vm1678 = vcmp.ge.f32.partialorder %v1637, %v1649
        %vm1679 = vcmp.ge.f32.partialorder %v1637, %v1655
        %v1680 = vsel %vm1656, 1, 0
        %v1681 = vsel %vm1657, 1, 0
        %v1682 = vsel %vm1658, 1, 0
        %v1683 = vsel %vm1659, 1, 0
        %v1684 = vsel %vm1660, 1, 0
        %v1685 = vsel %vm1661, 1, 0
        %v1686 = vsel %vm1662, 1, 0
        %v1687 = vsel %vm1663, 1, 0
        %v1688 = vsel %vm1664, 1, 0
        %v1689 = vsel %vm1665, 1, 0
        %v1690 = vsel %vm1666, 1, 0
        %v1691 = vsel %vm1667, 1, 0
        %v1692 = vsel %vm1668, 1, 0
        %v1693 = vsel %vm1669, 1, 0
        %v1694 = vsel %vm1670, 1, 0
        %v1695 = vsel %vm1671, 1, 0
        %v1696 = vsel %vm1672, 1, 0
        %v1697 = vsel %vm1673, 1, 0
        %v1698 = vsel %vm1674, 1, 0
        %v1699 = vsel %vm1675, 1, 0
        %v1700 = vsel %vm1676, 1, 0
        %v1701 = vsel %vm1677, 1, 0
        %v1702 = vsel %vm1678, 1, 0
        %v1703 = vsel %vm1679, 1, 0
        %v1704 = vcvt.s32.f32 %v1680
        %v1705 = vcvt.s32.f32 %v1681
        %v1706 = vcvt.s32.f32 %v1682
        %v1707 = vcvt.s32.f32 %v1683
        %v1708 = vcvt.s32.f32 %v1684
        %v1709 = vcvt.s32.f32 %v1685
        %v1710 = vcvt.s32.f32 %v1686
        %v1711 = vcvt.s32.f32 %v1687
        %v1712 = vcvt.s32.f32 %v1688
        %v1713 = vcvt.s32.f32 %v1689
        %v1714 = vcvt.s32.f32 %v1690
        %v1715 = vcvt.s32.f32 %v1691
        %v1716 = vcvt.s32.f32 %v1692
        %v1717 = vcvt.s32.f32 %v1693
        %v1718 = vcvt.s32.f32 %v1694
        %v1719 = vcvt.s32.f32 %v1695
        %v1720 = vcvt.s32.f32 %v1696
        %v1721 = vcvt.s32.f32 %v1697
        %v1722 = vcvt.s32.f32 %v1698
        %v1723 = vcvt.s32.f32 %v1699
        %v1724 = vcvt.s32.f32 %v1700
        %v1725 = vcvt.s32.f32 %v1701
        %v1726 = vcvt.s32.f32 %v1702
        %v1727 = vcvt.s32.f32 %v1703
        %v1729 = vrot.slane %v1503, 1
        %v1730 = vrot.slane %v1503, 2
        %v1731 = vrot.slane %v1503, 3
        %v1732 = vrot.slane %v1503, 4
        %v1733 = vrot.slane %v1503, 5
        %v1734 = vrot.slane %v1503, 6
        %v1735 = vrot.slane %v1503, 7
        %v1736 = vperm.slane %v1503, 0
        %v1737 = vperm.slane %v1729, 0
        %v1738 = vperm.slane %v1730, 0
        %v1739 = vperm.slane %v1731, 0
        %v1740 = vperm.slane %v1732, 0
        %v1741 = vperm.slane %v1733, 0
        %v1742 = vperm.slane %v1734, 0
        %v1743 = vperm.slane %v1735, 0
        %v1752 = vmul.f32 %v1704, %v1736
        %v1753 = vmul.f32 %v1705, %v1736
        %v1754 = vmul.f32 %v1706, %v1736
        %v1755 = vmul.f32 %v1707, %v1737
        %v1756 = vmul.f32 %v1708, %v1737
        %v1757 = vmul.f32 %v1709, %v1737
        %v1758 = vmul.f32 %v1710, %v1738
        %v1759 = vmul.f32 %v1711, %v1738
        %v1760 = vmul.f32 %v1712, %v1738
        %v1761 = vmul.f32 %v1713, %v1739
        %v1762 = vmul.f32 %v1714, %v1739
        %v1763 = vmul.f32 %v1715, %v1739
        %v1764 = vmul.f32 %v1716, %v1740
        %v1765 = vmul.f32 %v1717, %v1740
        %v1766 = vmul.f32 %v1718, %v1740
        %v1767 = vmul.f32 %v1719, %v1741
        %v1768 = vmul.f32 %v1720, %v1741
        %v1769 = vmul.f32 %v1721, %v1741
        %v1770 = vmul.f32 %v1722, %v1742
        %v1771 = vmul.f32 %v1723, %v1742
        %v1772 = vmul.f32 %v1724, %v1742
        %v1773 = vmul.f32 %v1725, %v1743
        %v1774 = vmul.f32 %v1726, %v1743
        %v1775 = vmul.f32 %v1727, %v1743
        %vm1776 = vcmask 195584
        %v1777 = vsel %vm1776, %v1752, 0.0
        %1778 = vadd.xlane.f32.xlu0 %v1777
        %v1779 = vpop.xlane.xlu0 %1778
        %v1780 = vsel %vm1776, %v1753, 0.0
        %1781 = vadd.xlane.f32.xlu0 %v1780
        %v1782 = vpop.xlane.xlu0 %1781
        %v1783 = vsel %vm1776, %v1754, 0.0
        %1784 = vadd.xlane.f32.xlu0 %v1783
        %v1785 = vpop.xlane.xlu0 %1784
        %v1786 = vsel %vm1776, %v1755, 0.0
        %1787 = vadd.xlane.f32.xlu0 %v1786
        %v1788 = vpop.xlane.xlu0 %1787
        %v1789 = vsel %vm1776, %v1756, 0.0
        %1790 = vadd.xlane.f32.xlu0 %v1789
        %v1791 = vpop.xlane.xlu0 %1790
        %v1792 = vsel %vm1776, %v1757, 0.0
        %1793 = vadd.xlane.f32.xlu0 %v1792
        %v1794 = vpop.xlane.xlu0 %1793
        %v1795 = vsel %vm1776, %v1758, 0.0
        %1796 = vadd.xlane.f32.xlu0 %v1795
        %v1797 = vpop.xlane.xlu0 %1796
        %v1798 = vsel %vm1776, %v1759, 0.0
        %1799 = vadd.xlane.f32.xlu0 %v1798
        %v1800 = vpop.xlane.xlu0 %1799
        %v1801 = vsel %vm1776, %v1760, 0.0
        %1802 = vadd.xlane.f32.xlu0 %v1801
        %v1803 = vpop.xlane.xlu0 %1802
        %v1804 = vsel %vm1776, %v1761, 0.0
        %1805 = vadd.xlane.f32.xlu0 %v1804
        %v1806 = vpop.xlane.xlu0 %1805
        %v1807 = vsel %vm1776, %v1762, 0.0
        %1808 = vadd.xlane.f32.xlu0 %v1807
        %v1809 = vpop.xlane.xlu0 %1808
        %v1810 = vsel %vm1776, %v1763, 0.0
        %1811 = vadd.xlane.f32.xlu0 %v1810
        %v1812 = vpop.xlane.xlu0 %1811
        %v1813 = vsel %vm1776, %v1764, 0.0
        %1814 = vadd.xlane.f32.xlu0 %v1813
        %v1815 = vpop.xlane.xlu0 %1814
        %v1816 = vsel %vm1776, %v1765, 0.0
        %1817 = vadd.xlane.f32.xlu0 %v1816
        %v1818 = vpop.xlane.xlu0 %1817
        %v1819 = vsel %vm1776, %v1766, 0.0
        %1820 = vadd.xlane.f32.xlu0 %v1819
        %v1821 = vpop.xlane.xlu0 %1820
        %v1822 = vsel %vm1776, %v1767, 0.0
        %1823 = vadd.xlane.f32.xlu0 %v1822
        %v1824 = vpop.xlane.xlu0 %1823
        %v1825 = vsel %vm1776, %v1768, 0.0
        %1826 = vadd.xlane.f32.xlu0 %v1825
        %v1827 = vpop.xlane.xlu0 %1826
        %v1828 = vsel %vm1776, %v1769, 0.0
        %1829 = vadd.xlane.f32.xlu0 %v1828
        %v1830 = vpop.xlane.xlu0 %1829
        %v1831 = vsel %vm1776, %v1770, 0.0
        %1832 = vadd.xlane.f32.xlu0 %v1831
        %v1833 = vpop.xlane.xlu0 %1832
        %v1834 = vsel %vm1776, %v1771, 0.0
        %1835 = vadd.xlane.f32.xlu0 %v1834
        %v1836 = vpop.xlane.xlu0 %1835
        %v1837 = vsel %vm1776, %v1772, 0.0
        %1838 = vadd.xlane.f32.xlu0 %v1837
        %v1839 = vpop.xlane.xlu0 %1838
        %v1840 = vsel %vm1776, %v1773, 0.0
        %1841 = vadd.xlane.f32.xlu0 %v1840
        %v1842 = vpop.xlane.xlu0 %1841
        %v1843 = vsel %vm1776, %v1774, 0.0
        %1844 = vadd.xlane.f32.xlu0 %v1843
        %v1845 = vpop.xlane.xlu0 %1844
        %v1846 = vsel %vm1776, %v1775, 0.0
        %1847 = vadd.xlane.f32.xlu0 %v1846
        %v1848 = vpop.xlane.xlu0 %1847
        %v1849 = vmul.f32 %v1752, %v1504
        %v1850 = vmul.f32 %v1753, %v1504
        %v1851 = vmul.f32 %v1754, %v1504
        %v1852 = vmul.f32 %v1755, %v1523
        %v1853 = vmul.f32 %v1756, %v1523
        %v1854 = vmul.f32 %v1757, %v1523
        %v1855 = vmul.f32 %v1758, %v1542
        %v1856 = vmul.f32 %v1759, %v1542
        %v1857 = vmul.f32 %v1760, %v1542
        %v1858 = vmul.f32 %v1761, %v1561
        %v1859 = vmul.f32 %v1762, %v1561
        %v1860 = vmul.f32 %v1763, %v1561
        %v1861 = vmul.f32 %v1764, %v1580
        %v1862 = vmul.f32 %v1765, %v1580
        %v1863 = vmul.f32 %v1766, %v1580
        %v1864 = vmul.f32 %v1767, %v1599
        %v1865 = vmul.f32 %v1768, %v1599
        %v1866 = vmul.f32 %v1769, %v1599
        %v1867 = vmul.f32 %v1770, %v1618
        %v1868 = vmul.f32 %v1771, %v1618
        %v1869 = vmul.f32 %v1772, %v1618
        %v1870 = vmul.f32 %v1773, %v1637
        %v1871 = vmul.f32 %v1774, %v1637
        %v1872 = vmul.f32 %v1775, %v1637
        %v1873 = vsel %vm1776, %v1849, 0.0
        %1874 = vadd.xlane.f32.xlu0 %v1873
        %v1875 = vpop.xlane.xlu0 %1874
        %v1876 = vsel %vm1776, %v1850, 0.0
        %1877 = vadd.xlane.f32.xlu0 %v1876
        %v1878 = vpop.xlane.xlu0 %1877
        %v1879 = vsel %vm1776, %v1851, 0.0
        %1880 = vadd.xlane.f32.xlu0 %v1879
        %v1881 = vpop.xlane.xlu0 %1880
        %v1882 = vsel %vm1776, %v1852, 0.0
        %1883 = vadd.xlane.f32.xlu0 %v1882
        %v1884 = vpop.xlane.xlu0 %1883
        %v1885 = vsel %vm1776, %v1853, 0.0
        %1886 = vadd.xlane.f32.xlu0 %v1885
        %v1887 = vpop.xlane.xlu0 %1886
        %v1888 = vsel %vm1776, %v1854, 0.0
        %1889 = vadd.xlane.f32.xlu0 %v1888
        %v1890 = vpop.xlane.xlu0 %1889
        %v1891 = vsel %vm1776, %v1855, 0.0
        %1892 = vadd.xlane.f32.xlu0 %v1891
        %v1893 = vpop.xlane.xlu0 %1892
        %v1894 = vsel %vm1776, %v1856, 0.0
        %1895 = vadd.xlane.f32.xlu0 %v1894
        %v1896 = vpop.xlane.xlu0 %1895
        %v1897 = vsel %vm1776, %v1857, 0.0
        %1898 = vadd.xlane.f32.xlu0 %v1897
        %v1899 = vpop.xlane.xlu0 %1898
        %v1900 = vsel %vm1776, %v1858, 0.0
        %1901 = vadd.xlane.f32.xlu0 %v1900
        %v1902 = vpop.xlane.xlu0 %1901
        %v1903 = vsel %vm1776, %v1859, 0.0
        %1904 = vadd.xlane.f32.xlu0 %v1903
        %v1905 = vpop.xlane.xlu0 %1904
        %v1906 = vsel %vm1776, %v1860, 0.0
        %1907 = vadd.xlane.f32.xlu0 %v1906
        %v1908 = vpop.xlane.xlu0 %1907
        %v1909 = vsel %vm1776, %v1861, 0.0
        %1910 = vadd.xlane.f32.xlu0 %v1909
        %v1911 = vpop.xlane.xlu0 %1910
        %v1912 = vsel %vm1776, %v1862, 0.0
        %1913 = vadd.xlane.f32.xlu0 %v1912
        %v1914 = vpop.xlane.xlu0 %1913
        %v1915 = vsel %vm1776, %v1863, 0.0
        %1916 = vadd.xlane.f32.xlu0 %v1915
        %v1917 = vpop.xlane.xlu0 %1916
        %v1918 = vsel %vm1776, %v1864, 0.0
        %1919 = vadd.xlane.f32.xlu0 %v1918
        %v1920 = vpop.xlane.xlu0 %1919
        %v1921 = vsel %vm1776, %v1865, 0.0
        %1922 = vadd.xlane.f32.xlu0 %v1921
        %v1923 = vpop.xlane.xlu0 %1922
        %v1924 = vsel %vm1776, %v1866, 0.0
        %1925 = vadd.xlane.f32.xlu0 %v1924
        %v1926 = vpop.xlane.xlu0 %1925
        %v1927 = vsel %vm1776, %v1867, 0.0
        %1928 = vadd.xlane.f32.xlu0 %v1927
        %v1929 = vpop.xlane.xlu0 %1928
        %v1930 = vsel %vm1776, %v1868, 0.0
        %1931 = vadd.xlane.f32.xlu0 %v1930
        %v1932 = vpop.xlane.xlu0 %1931
        %v1933 = vsel %vm1776, %v1869, 0.0
        %1934 = vadd.xlane.f32.xlu0 %v1933
        %v1935 = vpop.xlane.xlu0 %1934
        %v1936 = vsel %vm1776, %v1870, 0.0
        %1937 = vadd.xlane.f32.xlu0 %v1936
        %v1938 = vpop.xlane.xlu0 %1937
        %v1939 = vsel %vm1776, %v1871, 0.0
        %1940 = vadd.xlane.f32.xlu0 %v1939
        %v1941 = vpop.xlane.xlu0 %1940
        %v1942 = vsel %vm1776, %v1872, 0.0
        %1943 = vadd.xlane.f32.xlu0 %v1942
        %v1944 = vpop.xlane.xlu0 %1943
        %v1953 = vperm.slane %v1323, 0
        %v1954 = vlaneseq
        %v1955 = vshrl.u32 %v1954, 7
        %1957 = vset.pattern.permute.xlu0 %v1955
        %1958 = vperm.xlu0 %1957, %v1953
        %v1959 = vpop.permute.xlu0 %1958
        %v1960 = vlaneseq
        %v1961 = vshrl.u32 %v1960, 7
        %v1962 = vadd.s32 %v1961, 8
        %1963 = vset.pattern.permute.xlu0 %v1962
        %1964 = vperm.xlu0 %1963, %v1953
        %v1965 = vpop.permute.xlu0 %1964
        %v1966 = vlaneseq
        %v1967 = vshrl.u32 %v1966, 7
        %v1968 = vadd.s32 %v1967, 16
        %1969 = vset.pattern.permute.xlu0 %v1968
        %1970 = vperm.xlu0 %1969, %v1953
        %v1971 = vpop.permute.xlu0 %1970
        %v1972 = vperm.slane %v1343, 0
        %v1973 = vlaneseq
        %v1974 = vshrl.u32 %v1973, 7
        %1976 = vset.pattern.permute.xlu0 %v1974
        %1977 = vperm.xlu0 %1976, %v1972
        %v1978 = vpop.permute.xlu0 %1977
        %v1979 = vlaneseq
        %v1980 = vshrl.u32 %v1979, 7
        %v1981 = vadd.s32 %v1980, 8
        %1982 = vset.pattern.permute.xlu0 %v1981
        %1983 = vperm.xlu0 %1982, %v1972
        %v1984 = vpop.permute.xlu0 %1983
        %v1985 = vlaneseq
        %v1986 = vshrl.u32 %v1985, 7
        %v1987 = vadd.s32 %v1986, 16
        %1988 = vset.pattern.permute.xlu0 %v1987
        %1989 = vperm.xlu0 %1988, %v1972
        %v1990 = vpop.permute.xlu0 %1989
        %v1991 = vperm.slane %v1363, 0
        %v1992 = vlaneseq
        %v1993 = vshrl.u32 %v1992, 7
        %1995 = vset.pattern.permute.xlu0 %v1993
        %1996 = vperm.xlu0 %1995, %v1991
        %v1997 = vpop.permute.xlu0 %1996
        %v1998 = vlaneseq
        %v1999 = vshrl.u32 %v1998, 7
        %v2000 = vadd.s32 %v1999, 8
        %2001 = vset.pattern.permute.xlu0 %v2000
        %2002 = vperm.xlu0 %2001, %v1991
        %v2003 = vpop.permute.xlu0 %2002
        %v2004 = vlaneseq
        %v2005 = vshrl.u32 %v2004, 7
        %v2006 = vadd.s32 %v2005, 16
        %2007 = vset.pattern.permute.xlu0 %v2006
        %2008 = vperm.xlu0 %2007, %v1991
        %v2009 = vpop.permute.xlu0 %2008
        %v2010 = vperm.slane %v1383, 0
        %v2011 = vlaneseq
        %v2012 = vshrl.u32 %v2011, 7
        %2014 = vset.pattern.permute.xlu0 %v2012
        %2015 = vperm.xlu0 %2014, %v2010
        %v2016 = vpop.permute.xlu0 %2015
        %v2017 = vlaneseq
        %v2018 = vshrl.u32 %v2017, 7
        %v2019 = vadd.s32 %v2018, 8
        %2020 = vset.pattern.permute.xlu0 %v2019
        %2021 = vperm.xlu0 %2020, %v2010
        %v2022 = vpop.permute.xlu0 %2021
        %v2023 = vlaneseq
        %v2024 = vshrl.u32 %v2023, 7
        %v2025 = vadd.s32 %v2024, 16
        %2026 = vset.pattern.permute.xlu0 %v2025
        %2027 = vperm.xlu0 %2026, %v2010
        %v2028 = vpop.permute.xlu0 %2027
        %v2029 = vperm.slane %v1403, 0
        %v2030 = vlaneseq
        %v2031 = vshrl.u32 %v2030, 7
        %2033 = vset.pattern.permute.xlu0 %v2031
        %2034 = vperm.xlu0 %2033, %v2029
        %v2035 = vpop.permute.xlu0 %2034
        %v2036 = vlaneseq
        %v2037 = vshrl.u32 %v2036, 7
        %v2038 = vadd.s32 %v2037, 8
        %2039 = vset.pattern.permute.xlu0 %v2038
        %2040 = vperm.xlu0 %2039, %v2029
        %v2041 = vpop.permute.xlu0 %2040
        %v2042 = vlaneseq
        %v2043 = vshrl.u32 %v2042, 7
        %v2044 = vadd.s32 %v2043, 16
        %2045 = vset.pattern.permute.xlu0 %v2044
        %2046 = vperm.xlu0 %2045, %v2029
        %v2047 = vpop.permute.xlu0 %2046
        %v2048 = vperm.slane %v1423, 0
        %v2049 = vlaneseq
        %v2050 = vshrl.u32 %v2049, 7
        %2052 = vset.pattern.permute.xlu0 %v2050
        %2053 = vperm.xlu0 %2052, %v2048
        %v2054 = vpop.permute.xlu0 %2053
        %v2055 = vlaneseq
        %v2056 = vshrl.u32 %v2055, 7
        %v2057 = vadd.s32 %v2056, 8
        %2058 = vset.pattern.permute.xlu0 %v2057
        %2059 = vperm.xlu0 %2058, %v2048
        %v2060 = vpop.permute.xlu0 %2059
        %v2061 = vlaneseq
        %v2062 = vshrl.u32 %v2061, 7
        %v2063 = vadd.s32 %v2062, 16
        %2064 = vset.pattern.permute.xlu0 %v2063
        %2065 = vperm.xlu0 %2064, %v2048
        %v2066 = vpop.permute.xlu0 %2065
        %v2067 = vperm.slane %v1443, 0
        %v2068 = vlaneseq
        %v2069 = vshrl.u32 %v2068, 7
        %2071 = vset.pattern.permute.xlu0 %v2069
        %2072 = vperm.xlu0 %2071, %v2067
        %v2073 = vpop.permute.xlu0 %2072
        %v2074 = vlaneseq
        %v2075 = vshrl.u32 %v2074, 7
        %v2076 = vadd.s32 %v2075, 8
        %2077 = vset.pattern.permute.xlu0 %v2076
        %2078 = vperm.xlu0 %2077, %v2067
        %v2079 = vpop.permute.xlu0 %2078
        %v2080 = vlaneseq
        %v2081 = vshrl.u32 %v2080, 7
        %v2082 = vadd.s32 %v2081, 16
        %2083 = vset.pattern.permute.xlu0 %v2082
        %2084 = vperm.xlu0 %2083, %v2067
        %v2085 = vpop.permute.xlu0 %2084
        %v2086 = vperm.slane %v1463, 0
        %v2087 = vlaneseq
        %v2088 = vshrl.u32 %v2087, 7
        %2090 = vset.pattern.permute.xlu0 %v2088
        %2091 = vperm.xlu0 %2090, %v2086
        %v2092 = vpop.permute.xlu0 %2091
        %v2093 = vlaneseq
        %v2094 = vshrl.u32 %v2093, 7
        %v2095 = vadd.s32 %v2094, 8
        %2096 = vset.pattern.permute.xlu0 %v2095
        %2097 = vperm.xlu0 %2096, %v2086
        %v2098 = vpop.permute.xlu0 %2097
        %v2099 = vlaneseq
        %v2100 = vshrl.u32 %v2099, 7
        %v2101 = vadd.s32 %v2100, 16
        %2102 = vset.pattern.permute.xlu0 %v2101
        %2103 = vperm.xlu0 %2102, %v2086
        %v2104 = vpop.permute.xlu0 %2103
        %v2129 = vmul.f32 %v1779, %v1959
        %v2130 = vmul.f32 %v1782, %v1965
        %v2131 = vmul.f32 %v1785, %v1971
        %v2132 = vmul.f32 %v1788, %v1978
        %v2133 = vmul.f32 %v1791, %v1984
        %v2134 = vmul.f32 %v1794, %v1990
        %v2135 = vmul.f32 %v1797, %v1997
        %v2136 = vmul.f32 %v1800, %v2003
        %v2137 = vmul.f32 %v1803, %v2009
        %v2138 = vmul.f32 %v1806, %v2016
        %v2139 = vmul.f32 %v1809, %v2022
        %v2140 = vmul.f32 %v1812, %v2028
        %v2141 = vmul.f32 %v1815, %v2035
        %v2142 = vmul.f32 %v1818, %v2041
        %v2143 = vmul.f32 %v1821, %v2047
        %v2144 = vmul.f32 %v1824, %v2054
        %v2145 = vmul.f32 %v1827, %v2060
        %v2146 = vmul.f32 %v1830, %v2066
        %v2147 = vmul.f32 %v1833, %v2073
        %v2148 = vmul.f32 %v1836, %v2079
        %v2149 = vmul.f32 %v1839, %v2085
        %v2150 = vmul.f32 %v1842, %v2092
        %v2151 = vmul.f32 %v1845, %v2098
        %v2152 = vmul.f32 %v1848, %v2104
        %v2153 = vadd.f32 %v2129, 1.0
        %v2154 = vadd.f32 %v2130, 1.0
        %v2155 = vadd.f32 %v2131, 1.0
        %v2156 = vadd.f32 %v2132, 1.0
        %v2157 = vadd.f32 %v2133, 1.0
        %v2158 = vadd.f32 %v2134, 1.0
        %v2159 = vadd.f32 %v2135, 1.0
        %v2160 = vadd.f32 %v2136, 1.0
        %v2161 = vadd.f32 %v2137, 1.0
        %v2162 = vadd.f32 %v2138, 1.0
        %v2163 = vadd.f32 %v2139, 1.0
        %v2164 = vadd.f32 %v2140, 1.0
        %v2165 = vadd.f32 %v2141, 1.0
        %v2166 = vadd.f32 %v2142, 1.0
        %v2167 = vadd.f32 %v2143, 1.0
        %v2168 = vadd.f32 %v2144, 1.0
        %v2169 = vadd.f32 %v2145, 1.0
        %v2170 = vadd.f32 %v2146, 1.0
        %v2171 = vadd.f32 %v2147, 1.0
        %v2172 = vadd.f32 %v2148, 1.0
        %v2173 = vadd.f32 %v2149, 1.0
        %v2174 = vadd.f32 %v2150, 1.0
        %v2175 = vadd.f32 %v2151, 1.0
        %v2176 = vadd.f32 %v2152, 1.0
        %vm2177 = vcmp.gt.f32.partialorder %v2153, %v1875
        %vm2178 = vcmp.gt.f32.partialorder %v2154, %v1878
        %vm2179 = vcmp.gt.f32.partialorder %v2155, %v1881
        %vm2180 = vcmp.gt.f32.partialorder %v2156, %v1884
        %vm2181 = vcmp.gt.f32.partialorder %v2157, %v1887
        %vm2182 = vcmp.gt.f32.partialorder %v2158, %v1890
        %vm2183 = vcmp.gt.f32.partialorder %v2159, %v1893
        %vm2184 = vcmp.gt.f32.partialorder %v2160, %v1896
        %vm2185 = vcmp.gt.f32.partialorder %v2161, %v1899
        %vm2186 = vcmp.gt.f32.partialorder %v2162, %v1902
        %vm2187 = vcmp.gt.f32.partialorder %v2163, %v1905
        %vm2188 = vcmp.gt.f32.partialorder %v2164, %v1908
        %vm2189 = vcmp.gt.f32.partialorder %v2165, %v1911
        %vm2190 = vcmp.gt.f32.partialorder %v2166, %v1914
        %vm2191 = vcmp.gt.f32.partialorder %v2167, %v1917
        %vm2192 = vcmp.gt.f32.partialorder %v2168, %v1920
        %vm2193 = vcmp.gt.f32.partialorder %v2169, %v1923
        %vm2194 = vcmp.gt.f32.partialorder %v2170, %v1926
        %vm2195 = vcmp.gt.f32.partialorder %v2171, %v1929
        %vm2196 = vcmp.gt.f32.partialorder %v2172, %v1932
        %vm2197 = vcmp.gt.f32.partialorder %v2173, %v1935
        %vm2198 = vcmp.gt.f32.partialorder %v2174, %v1938
        %vm2199 = vcmp.gt.f32.partialorder %v2175, %v1941
        %vm2200 = vcmp.gt.f32.partialorder %v2176, %v1944
        %v2201 = vlaneseq
        %v2202 = vshrl.u32 %v2201, 7
        %2204 = vset.pattern.permute.xlu0 %v2202
        %2205 = vperm.xlu0 %2204, %v1503
        %v2206 = vpop.permute.xlu0 %2205
        %v2207 = vlaneseq
        %v2208 = vshrl.u32 %v2207, 7
        %v2209 = vadd.s32 %v2208, 8
        %2210 = vset.pattern.permute.xlu0 %v2209
        %2211 = vperm.xlu0 %2210, %v1503
        %v2212 = vpop.permute.xlu0 %2211
        %v2213 = vlaneseq
        %v2214 = vshrl.u32 %v2213, 7
        %v2215 = vadd.s32 %v2214, 16
        %2216 = vset.pattern.permute.xlu0 %v2215
        %2217 = vperm.xlu0 %2216, %v1503
        %v2218 = vpop.permute.xlu0 %2217
        %v2222 = vsel %vm2177, %v2206, 0.0
        %v2223 = vsel %vm2178, %v2212, 0.0
        %v2224 = vsel %vm2179, %v2218, 0.0
        %v2225 = vsel %vm2180, %v2206, 0.0
        %v2226 = vsel %vm2181, %v2212, 0.0
        %v2227 = vsel %vm2182, %v2218, 0.0
        %v2228 = vsel %vm2183, %v2206, 0.0
        %v2229 = vsel %vm2184, %v2212, 0.0
        %v2230 = vsel %vm2185, %v2218, 0.0
        %v2231 = vsel %vm2186, %v2206, 0.0
        %v2232 = vsel %vm2187, %v2212, 0.0
        %v2233 = vsel %vm2188, %v2218, 0.0
        %v2234 = vsel %vm2189, %v2206, 0.0
        %v2235 = vsel %vm2190, %v2212, 0.0
        %v2236 = vsel %vm2191, %v2218, 0.0
        %v2237 = vsel %vm2192, %v2206, 0.0
        %v2238 = vsel %vm2193, %v2212, 0.0
        %v2239 = vsel %vm2194, %v2218, 0.0
        %v2240 = vsel %vm2195, %v2206, 0.0
        %v2241 = vsel %vm2196, %v2212, 0.0
        %v2242 = vsel %vm2197, %v2218, 0.0
        %v2243 = vsel %vm2198, %v2206, 0.0
        %v2244 = vsel %vm2199, %v2212, 0.0
        %v2245 = vsel %vm2200, %v2218, 0.0
        %2270 = vset.pattern.permute.xlu0 0
        %2271 = vperm.xlu0 %2270, %v2222
        %v2272 = vpop.permute.xlu0 %2271
        %2273 = vset.pattern.permute.xlu0 0
        %2274 = vperm.xlu0 %2273, %v2223
        %v2275 = vpop.permute.xlu0 %2274
        %2276 = vset.pattern.permute.xlu0 0
        %2277 = vperm.xlu0 %2276, %v2224
        %v2278 = vpop.permute.xlu0 %2277
        %2279 = vset.pattern.permute.xlu0 0
        %2280 = vperm.xlu0 %2279, %v2225
        %v2281 = vpop.permute.xlu0 %2280
        %2282 = vset.pattern.permute.xlu0 0
        %2283 = vperm.xlu0 %2282, %v2226
        %v2284 = vpop.permute.xlu0 %2283
        %2285 = vset.pattern.permute.xlu0 0
        %2286 = vperm.xlu0 %2285, %v2227
        %v2287 = vpop.permute.xlu0 %2286
        %2288 = vset.pattern.permute.xlu0 0
        %2289 = vperm.xlu0 %2288, %v2228
        %v2290 = vpop.permute.xlu0 %2289
        %2291 = vset.pattern.permute.xlu0 0
        %2292 = vperm.xlu0 %2291, %v2229
        %v2293 = vpop.permute.xlu0 %2292
        %2294 = vset.pattern.permute.xlu0 0
        %2295 = vperm.xlu0 %2294, %v2230
        %v2296 = vpop.permute.xlu0 %2295
        %2297 = vset.pattern.permute.xlu0 0
        %2298 = vperm.xlu0 %2297, %v2231
        %v2299 = vpop.permute.xlu0 %2298
        %2300 = vset.pattern.permute.xlu0 0
        %2301 = vperm.xlu0 %2300, %v2232
        %v2302 = vpop.permute.xlu0 %2301
        %2303 = vset.pattern.permute.xlu0 0
        %2304 = vperm.xlu0 %2303, %v2233
        %v2305 = vpop.permute.xlu0 %2304
        %2306 = vset.pattern.permute.xlu0 0
        %2307 = vperm.xlu0 %2306, %v2234
        %v2308 = vpop.permute.xlu0 %2307
        %2309 = vset.pattern.permute.xlu0 0
        %2310 = vperm.xlu0 %2309, %v2235
        %v2311 = vpop.permute.xlu0 %2310
        %2312 = vset.pattern.permute.xlu0 0
        %2313 = vperm.xlu0 %2312, %v2236
        %v2314 = vpop.permute.xlu0 %2313
        %2315 = vset.pattern.permute.xlu0 0
        %2316 = vperm.xlu0 %2315, %v2237
        %v2317 = vpop.permute.xlu0 %2316
        %2318 = vset.pattern.permute.xlu0 0
        %2319 = vperm.xlu0 %2318, %v2238
        %v2320 = vpop.permute.xlu0 %2319
        %2321 = vset.pattern.permute.xlu0 0
        %2322 = vperm.xlu0 %2321, %v2239
        %v2323 = vpop.permute.xlu0 %2322
        %2324 = vset.pattern.permute.xlu0 0
        %2325 = vperm.xlu0 %2324, %v2240
        %v2326 = vpop.permute.xlu0 %2325
        %2327 = vset.pattern.permute.xlu0 0
        %2328 = vperm.xlu0 %2327, %v2241
        %v2329 = vpop.permute.xlu0 %2328
        %2330 = vset.pattern.permute.xlu0 0
        %2331 = vperm.xlu0 %2330, %v2242
        %v2332 = vpop.permute.xlu0 %2331
        %2333 = vset.pattern.permute.xlu0 0
        %2334 = vperm.xlu0 %2333, %v2243
        %v2335 = vpop.permute.xlu0 %2334
        %2336 = vset.pattern.permute.xlu0 0
        %2337 = vperm.xlu0 %2336, %v2244
        %v2338 = vpop.permute.xlu0 %2337
        %2339 = vset.pattern.permute.xlu0 0
        %2340 = vperm.xlu0 %2339, %v2245
        %v2341 = vpop.permute.xlu0 %2340
        %v2342 = vperm.slane %v2272, %v1466
        %v2343 = vadd.s32 %v1466, 4294967288
        %v2344 = vperm.slane %v2275, %v2343
        %vm2345 = vcmask 130112
        %v2346 = vsel %vm2345, %v2344, %v2342
        %v2347 = vadd.s32 %v1466, 4294967280
        %v2348 = vperm.slane %v2278, %v2347
        %vm2349 = vcmask 195712
        %v2350 = vsel %vm2349, %v2348, %v2346
        %v2351 = vperm.slane %v2281, %v1466
        %v2352 = vperm.slane %v2284, %v2343
        %v2353 = vsel %vm2345, %v2352, %v2351
        %v2354 = vperm.slane %v2287, %v2347
        %v2355 = vsel %vm2349, %v2354, %v2353
        %v2356 = vperm.slane %v2290, %v1466
        %v2357 = vperm.slane %v2293, %v2343
        %v2358 = vsel %vm2345, %v2357, %v2356
        %v2359 = vperm.slane %v2296, %v2347
        %v2360 = vsel %vm2349, %v2359, %v2358
        %v2361 = vperm.slane %v2299, %v1466
        %v2362 = vperm.slane %v2302, %v2343
        %v2363 = vsel %vm2345, %v2362, %v2361
        %v2364 = vperm.slane %v2305, %v2347
        %v2365 = vsel %vm2349, %v2364, %v2363
        %v2366 = vperm.slane %v2308, %v1466
        %v2367 = vperm.slane %v2311, %v2343
        %v2368 = vsel %vm2345, %v2367, %v2366
        %v2369 = vperm.slane %v2314, %v2347
        %v2370 = vsel %vm2349, %v2369, %v2368
        %v2371 = vperm.slane %v2317, %v1466
        %v2372 = vperm.slane %v2320, %v2343
        %v2373 = vsel %vm2345, %v2372, %v2371
        %v2374 = vperm.slane %v2323, %v2347
        %v2375 = vsel %vm2349, %v2374, %v2373
        %v2376 = vperm.slane %v2326, %v1466
        %v2377 = vperm.slane %v2329, %v2343
        %v2378 = vsel %vm2345, %v2377, %v2376
        %v2379 = vperm.slane %v2332, %v2347
        %v2380 = vsel %vm2349, %v2379, %v2378
        %v2381 = vperm.slane %v2335, %v1466
        %v2382 = vperm.slane %v2338, %v2343
        %v2383 = vsel %vm2345, %v2382, %v2381
        %v2384 = vperm.slane %v2341, %v2347
        %v2385 = vsel %vm2349, %v2384, %v2383
        %vm2386 = vcmask 1041409
        %v2387 = vsel %vm2386, %v2355, %v2350
        %vm2388 = vcmask 1042434
        %v2389 = vsel %vm2388, %v2360, %v2387
        %vm2390 = vcmask 1043459
        %v2391 = vsel %vm2390, %v2365, %v2389
        %vm2392 = vcmask 1044484
        %v2393 = vsel %vm2392, %v2370, %v2391
        %vm2394 = vcmask 1045509
        %v2395 = vsel %vm2394, %v2375, %v2393
        %vm2396 = vcmask 1046534
        %v2397 = vsel %vm2396, %v2380, %v2395
        %vm2398 = vcmask 1047559
        %v2399 = vsel %vm2398, %v2385, %v2397
        %v2401 = vsel %vm1776, %v2399, 0.0
        %2402 = vadd.xlane.f32.xlu0 %v2401
        %v2403 = vpop.xlane.xlu0 %2402
        %v2404 = vmul.f32 %v2222, %v1959
        %v2405 = vmul.f32 %v2223, %v1965
        %v2406 = vmul.f32 %v2224, %v1971
        %v2407 = vmul.f32 %v2225, %v1978
        %v2408 = vmul.f32 %v2226, %v1984
        %v2409 = vmul.f32 %v2227, %v1990
        %v2410 = vmul.f32 %v2228, %v1997
        %v2411 = vmul.f32 %v2229, %v2003
        %v2412 = vmul.f32 %v2230, %v2009
        %v2413 = vmul.f32 %v2231, %v2016
        %v2414 = vmul.f32 %v2232, %v2022
        %v2415 = vmul.f32 %v2233, %v2028
        %v2416 = vmul.f32 %v2234, %v2035
        %v2417 = vmul.f32 %v2235, %v2041
        %v2418 = vmul.f32 %v2236, %v2047
        %v2419 = vmul.f32 %v2237, %v2054
        %v2420 = vmul.f32 %v2238, %v2060
        %v2421 = vmul.f32 %v2239, %v2066
        %v2422 = vmul.f32 %v2240, %v2073
        %v2423 = vmul.f32 %v2241, %v2079
        %v2424 = vmul.f32 %v2242, %v2085
        %v2425 = vmul.f32 %v2243, %v2092
        %v2426 = vmul.f32 %v2244, %v2098
        %v2427 = vmul.f32 %v2245, %v2104
        %2452 = vset.pattern.permute.xlu0 0
        %2453 = vperm.xlu0 %2452, %v2404
        %v2454 = vpop.permute.xlu0 %2453
        %2455 = vset.pattern.permute.xlu0 0
        %2456 = vperm.xlu0 %2455, %v2405
        %v2457 = vpop.permute.xlu0 %2456
        %2458 = vset.pattern.permute.xlu0 0
        %2459 = vperm.xlu0 %2458, %v2406
        %v2460 = vpop.permute.xlu0 %2459
        %2461 = vset.pattern.permute.xlu0 0
        %2462 = vperm.xlu0 %2461, %v2407
        %v2463 = vpop.permute.xlu0 %2462
        %2464 = vset.pattern.permute.xlu0 0
        %2465 = vperm.xlu0 %2464, %v2408
        %v2466 = vpop.permute.xlu0 %2465
        %2467 = vset.pattern.permute.xlu0 0
        %2468 = vperm.xlu0 %2467, %v2409
        %v2469 = vpop.permute.xlu0 %2468
        %2470 = vset.pattern.permute.xlu0 0
        %2471 = vperm.xlu0 %2470, %v2410
        %v2472 = vpop.permute.xlu0 %2471
        %2473 = vset.pattern.permute.xlu0 0
        %2474 = vperm.xlu0 %2473, %v2411
        %v2475 = vpop.permute.xlu0 %2474
        %2476 = vset.pattern.permute.xlu0 0
        %2477 = vperm.xlu0 %2476, %v2412
        %v2478 = vpop.permute.xlu0 %2477
        %2479 = vset.pattern.permute.xlu0 0
        %2480 = vperm.xlu0 %2479, %v2413
        %v2481 = vpop.permute.xlu0 %2480
        %2482 = vset.pattern.permute.xlu0 0
        %2483 = vperm.xlu0 %2482, %v2414
        %v2484 = vpop.permute.xlu0 %2483
        %2485 = vset.pattern.permute.xlu0 0
        %2486 = vperm.xlu0 %2485, %v2415
        %v2487 = vpop.permute.xlu0 %2486
        %2488 = vset.pattern.permute.xlu0 0
        %2489 = vperm.xlu0 %2488, %v2416
        %v2490 = vpop.permute.xlu0 %2489
        %2491 = vset.pattern.permute.xlu0 0
        %2492 = vperm.xlu0 %2491, %v2417
        %v2493 = vpop.permute.xlu0 %2492
        %2494 = vset.pattern.permute.xlu0 0
        %2495 = vperm.xlu0 %2494, %v2418
        %v2496 = vpop.permute.xlu0 %2495
        %2497 = vset.pattern.permute.xlu0 0
        %2498 = vperm.xlu0 %2497, %v2419
        %v2499 = vpop.permute.xlu0 %2498
        %2500 = vset.pattern.permute.xlu0 0
        %2501 = vperm.xlu0 %2500, %v2420
        %v2502 = vpop.permute.xlu0 %2501
        %2503 = vset.pattern.permute.xlu0 0
        %2504 = vperm.xlu0 %2503, %v2421
        %v2505 = vpop.permute.xlu0 %2504
        %2506 = vset.pattern.permute.xlu0 0
        %2507 = vperm.xlu0 %2506, %v2422
        %v2508 = vpop.permute.xlu0 %2507
        %2509 = vset.pattern.permute.xlu0 0
        %2510 = vperm.xlu0 %2509, %v2423
        %v2511 = vpop.permute.xlu0 %2510
        %2512 = vset.pattern.permute.xlu0 0
        %2513 = vperm.xlu0 %2512, %v2424
        %v2514 = vpop.permute.xlu0 %2513
        %2515 = vset.pattern.permute.xlu0 0
        %2516 = vperm.xlu0 %2515, %v2425
        %v2517 = vpop.permute.xlu0 %2516
        %2518 = vset.pattern.permute.xlu0 0
        %2519 = vperm.xlu0 %2518, %v2426
        %v2520 = vpop.permute.xlu0 %2519
        %2521 = vset.pattern.permute.xlu0 0
        %2522 = vperm.xlu0 %2521, %v2427
        %v2523 = vpop.permute.xlu0 %2522
        %v2524 = vperm.slane %v2454, %v1466
        %v2525 = vperm.slane %v2457, %v2343
        %v2526 = vsel %vm2345, %v2525, %v2524
        %v2527 = vperm.slane %v2460, %v2347
        %v2528 = vsel %vm2349, %v2527, %v2526
        %v2529 = vperm.slane %v2463, %v1466
        %v2530 = vperm.slane %v2466, %v2343
        %v2531 = vsel %vm2345, %v2530, %v2529
        %v2532 = vperm.slane %v2469, %v2347
        %v2533 = vsel %vm2349, %v2532, %v2531
        %v2534 = vperm.slane %v2472, %v1466
        %v2535 = vperm.slane %v2475, %v2343
        %v2536 = vsel %vm2345, %v2535, %v2534
        %v2537 = vperm.slane %v2478, %v2347
        %v2538 = vsel %vm2349, %v2537, %v2536
        %v2539 = vperm.slane %v2481, %v1466
        %v2540 = vperm.slane %v2484, %v2343
        %v2541 = vsel %vm2345, %v2540, %v2539
        %v2542 = vperm.slane %v2487, %v2347
        %v2543 = vsel %vm2349, %v2542, %v2541
        %v2544 = vperm.slane %v2490, %v1466
        %v2545 = vperm.slane %v2493, %v2343
        %v2546 = vsel %vm2345, %v2545, %v2544
        %v2547 = vperm.slane %v2496, %v2347
        %v2548 = vsel %vm2349, %v2547, %v2546
        %v2549 = vperm.slane %v2499, %v1466
        %v2550 = vperm.slane %v2502, %v2343
        %v2551 = vsel %vm2345, %v2550, %v2549
        %v2552 = vperm.slane %v2505, %v2347
        %v2553 = vsel %vm2349, %v2552, %v2551
        %v2554 = vperm.slane %v2508, %v1466
        %v2555 = vperm.slane %v2511, %v2343
        %v2556 = vsel %vm2345, %v2555, %v2554
        %v2557 = vperm.slane %v2514, %v2347
        %v2558 = vsel %vm2349, %v2557, %v2556
        %v2559 = vperm.slane %v2517, %v1466
        %v2560 = vperm.slane %v2520, %v2343
        %v2561 = vsel %vm2345, %v2560, %v2559
        %v2562 = vperm.slane %v2523, %v2347
        %v2563 = vsel %vm2349, %v2562, %v2561
        %v2564 = vsel %vm2386, %v2533, %v2528
        %v2565 = vsel %vm2388, %v2538, %v2564
        %v2566 = vsel %vm2390, %v2543, %v2565
        %v2567 = vsel %vm2392, %v2548, %v2566
        %v2568 = vsel %vm2394, %v2553, %v2567
        %v2569 = vsel %vm2396, %v2558, %v2568
        %v2570 = vsel %vm2398, %v2563, %v2569
        %v2572 = vsel %vm1776, %v2570, 0.0
        %2573 = vadd.xlane.f32.xlu0 %v2572
        %v2574 = vpop.xlane.xlu0 %2573
        %v2575 = vsub.f32 %v2574, 1.0
        %v2576 = vrcp.pop %v2403
        %v2577 = vmul.f32 %v2403, %v2576
        %v2578 = vsub.f32 1.0, %v2577
        %v2579 = vmul.f32 %v2576, %v2578
        %v2580 = vadd.f32 %v2576, %v2579
        %vm2581 = vweird.f32 %v2403
        %vm2582 = vweird.f32 %v2576
        %vm2583 = vmor %vm2581, %vm2582
        %v2584 = vsel %vm2583, %v2576, %v2580
        %v2585 = vand.u32 2147483647, %v2403
        %vm2586 = vcmp.eq.f32.partialorder %v2585, 8.507059e+37
        %v2587 = vand.u32 %v2403, 2147483648
        %v2588 = vor.u32 1.1754944e-38, %v2587
        %v2589 = vsel %vm2586, %v2588, %v2584
        %v2590 = vmul.f32 %v2575, %v2589
        %v2592 = vrot.slane %v2590, 1
        %v2593 = vrot.slane %v2590, 2
        %v2594 = vrot.slane %v2590, 3
        %v2595 = vrot.slane %v2590, 4
        %v2596 = vrot.slane %v2590, 5
        %v2597 = vrot.slane %v2590, 6
        %v2598 = vrot.slane %v2590, 7
        %v2607 = vsub.f32 %v1323, %v2590
        %v2608 = vsub.f32 %v1343, %v2592
        %v2609 = vsub.f32 %v1363, %v2593
        %v2610 = vsub.f32 %v1383, %v2594
        %v2611 = vsub.f32 %v1403, %v2595
        %v2612 = vsub.f32 %v1423, %v2596
        %v2613 = vsub.f32 %v1443, %v2597
        %v2614 = vsub.f32 %v1463, %v2598
        %v2615 = vmax.f32 %v2607, 0.0
        %v2616 = vmax.f32 %v2608, 0.0
        %v2617 = vmax.f32 %v2609, 0.0
        %v2618 = vmax.f32 %v2610, 0.0
        %v2619 = vmax.f32 %v2611, 0.0
        %v2620 = vmax.f32 %v2612, 0.0
        %v2621 = vmax.f32 %v2613, 0.0
        %v2622 = vmax.f32 %v2614, 0.0
        %v2623 = vtanh.pop %v1323
        %v2624 = vtanh.pop %v1343
        %v2625 = vtanh.pop %v1363
        %v2626 = vtanh.pop %v1383
        %v2627 = vtanh.pop %v1403
        %v2628 = vtanh.pop %v1423
        %v2629 = vtanh.pop %v1443
        %v2630 = vtanh.pop %v1463
        %v2631 = vadd.f32 %v2623, 1.0
        %v2632 = vadd.f32 %v2624, 1.0
        %v2633 = vadd.f32 %v2625, 1.0
        %v2634 = vadd.f32 %v2626, 1.0
        %v2635 = vadd.f32 %v2627, 1.0
        %v2636 = vadd.f32 %v2628, 1.0
        %v2637 = vadd.f32 %v2629, 1.0
        %v2638 = vadd.f32 %v2630, 1.0
        %v2639 = vand.u32 2147483647, %v1323
        %v2640 = vand.u32 2147483647, %v1343
        %v2641 = vand.u32 2147483647, %v1363
        %v2642 = vand.u32 2147483647, %v1383
        %v2643 = vand.u32 2147483647, %v1403
        %v2644 = vand.u32 2147483647, %v1423
        %v2645 = vand.u32 2147483647, %v1443
        %v2646 = vand.u32 2147483647, %v1463
        %vm2647 = vcmp.eq.s32.totalorder %v1500, 0
        %vm2648 = vcmp.eq.s32.totalorder %v1500, 1
        %v2657 = vrot.slane %v2640, 7
        %v2658 = vsel %vm2386, %v2657, %v2639
        %v2659 = vrot.slane %v2641, 6
        %v2660 = vsel %vm2388, %v2659, %v2658
        %v2661 = vrot.slane %v2642, 5
        %v2662 = vsel %vm2390, %v2661, %v2660
        %v2663 = vrot.slane %v2643, 4
        %v2664 = vsel %vm2392, %v2663, %v2662
        %v2665 = vrot.slane %v2644, 3
        %v2666 = vsel %vm2394, %v2665, %v2664
        %v2667 = vrot.slane %v2645, 2
        %v2668 = vsel %vm2396, %v2667, %v2666
        %v2669 = vrot.slane %v2646, 1
        %v2670 = vsel %vm2398, %v2669, %v2668
        %v2680 = vrot.slane %v2616, 7
        %v2681 = vsel %vm2386, %v2680, %v2615
        %v2682 = vrot.slane %v2617, 6
        %v2683 = vsel %vm2388, %v2682, %v2681
        %v2684 = vrot.slane %v2618, 5
        %v2685 = vsel %vm2390, %v2684, %v2683
        %v2686 = vrot.slane %v2619, 4
        %v2687 = vsel %vm2392, %v2686, %v2685
        %v2688 = vrot.slane %v2620, 3
        %v2689 = vsel %vm2394, %v2688, %v2687
        %v2690 = vrot.slane %v2621, 2
        %v2691 = vsel %vm2396, %v2690, %v2689
        %v2692 = vrot.slane %v2622, 1
        %v2693 = vsel %vm2398, %v2692, %v2691
        %v2695 = vsel %vm2648, %v2670, %v2693
        %v2704 = vrot.slane %v2632, 7
        %v2705 = vsel %vm2386, %v2704, %v2631
        %v2706 = vrot.slane %v2633, 6
        %v2707 = vsel %vm2388, %v2706, %v2705
        %v2708 = vrot.slane %v2634, 5
        %v2709 = vsel %vm2390, %v2708, %v2707
        %v2710 = vrot.slane %v2635, 4
        %v2711 = vsel %vm2392, %v2710, %v2709
        %v2712 = vrot.slane %v2636, 3
        %v2713 = vsel %vm2394, %v2712, %v2711
        %v2714 = vrot.slane %v2637, 2
        %v2715 = vsel %vm2396, %v2714, %v2713
        %v2716 = vrot.slane %v2638, 1
        %v2717 = vsel %vm2398, %v2716, %v2715
        %v2719 = vsel %vm2647, %v2717, %v2695
        %2720 = vst.msk [vmem:[%s409] sm:$0xff] %vm1776, %v2719
        %s2721 = sand.u32 %s166, 1
        %s2722 = scalar_lea.sflag [#allocation4], %s2721
        %s2723 = sand.u32 %s166, 1
        %s2724 = smul.addr %s2723, 8
        %s2725 = scalar_lea.vmem [#allocation11], %s2724
        // Predicated region
        $region61: #{tpu_custom_call.1} parent=39 // pred_check
          %p2726 = pneg %p176
        $region62: #{tpu_custom_call.1} parent=39 // pred_check_branch
          %2728 = sbr.rel (%p2726) target = $region64
        $region63: #{tpu_custom_call.1} parent=39 // pred_region
          %2730 = vsyncadd %s2722, 0
          %s2731 = smul.addr %s28, 8
          %s2732 = scalar_lea.hbm %s5, %s2731
          %s2734 = sshll.u32 %s2725, 4
          %s2735 = int_to_ptr.vmem [resolvable:$true] %s2734
          %s2736 = sshll.u32 %s2732, 4
          %s2737 = int_to_ptr.hbm [resolvable:$true] %s2736
          %2739 = dma.vmem_to_hbm [thread:$0]  %s2735, 128, %s2737, %s2722
        $region64: #{tpu_custom_call.1} parent=39 // pred_fallthru
          _
      $region40: #{tpu_custom_call.1} parent=5 // pred_fallthru
        _
      %p2740 = scmp.le.s32.totalorder 2, %s23
      // Predicated region
      $region65: #{tpu_custom_call.1} parent=5 // pred_check
        %p2741 = pneg %p2740
      $region66: #{tpu_custom_call.1} parent=5 // pred_check_branch
        %2743 = sbr.rel (%p2741) target = $region68
      $region67: #{tpu_custom_call.1} parent=5 // pred_region
        %s2744 = ssub.s32 %s23, 2
        // Predicated region
        $region69: #{tpu_custom_call.1} parent=67 // pred_check
          %p2745 = pneg %p182
        $region70: #{tpu_custom_call.1} parent=67 // pred_check_branch
          %2747 = sbr.rel (%p2745) target = $region72
        $region71: #{tpu_custom_call.1} parent=67 // pred_region
          %s2748 = sand.u32 %s167, 1
          %s2749 = scalar_lea.sflag [#allocation4], %s2748
          %s2750 = sand.u32 %s167, 1
          %s2751 = smul.addr %s2750, 8
          %s2752 = scalar_lea.vmem [#allocation11], %s2751
          %2754 = dma.done %s2749, 128
        $region72: #{tpu_custom_call.1} parent=67 // pred_fallthru
          _
      $region68: #{tpu_custom_call.1} parent=5 // pred_fallthru
        _
    $region6: #{tpu_custom_call.1} parent=1 // loop_footer
      %s27 = sadd.s32 1, %s23
    $region7: #{tpu_custom_call.1} parent=1 // loop_footer_branch
      %22 = sbr.rel target = $region3
    $region8: #{tpu_custom_call.1} parent=1 // loop_exit
      _
    %2755 = vsyncpa [#allocation3], 1
    %s2756 = scalar_lea.sflag [#allocation3], 1
    %2757 = vsyncpa %s2756, 1
    %2758 = vsyncpa [#allocation6], 1
    %s2759 = scalar_lea.sflag [#allocation6], 1
    %2760 = vsyncpa %s2759, 1
    %2761 = vsyncpa [#allocation9], 1
    %s2762 = scalar_lea.sflag [#allocation9], 1
    %2763 = vsyncpa %s2762, 1
    %2764 = vsyncpa [#allocation4], 1
    %s2765 = scalar_lea.sflag [#allocation4], 1
    %2766 = vsyncpa %s2765, 1

</llo_original>
